<compile_context>
chip_gen: v6e
topology: v6e:2x2x1
jax: 0.10.0
libtpu: 0.0.40
codegen_flags: <defaults>
</compile_context>

<pallas_src>
import numpy as np
import jax
import jax.numpy as jnp
from jax import lax
from jax.experimental import pallas as pl
from jax.experimental.pallas import tpu as pltpu

# ---------------- hyper-parameters (consistent with ModelC(c=4, k1=3, k2=2)) -----------
N = 2            # batch
CIN = 3          # conv input channels (CIFAR)
H = W = 32       # the module's Width formula assumes 32x32 input
C = 4            # conv output channels (c)
K1 = 3           # conv kernel (k1)
K2 = 2           # maxpool kernel/stride (k2)
Q = K2 * K2                      # 4 pool-window offsets
HO = H - K1 + 1                  # 30
WO = W - K1 + 1                  # 30
HP = HO // K2                    # 15  == Width in the module
WP = WO // K2                    # 15
HW_P = HP * WP                   # 225 valid spatial positions after pooling
HW_PAD = 256                     # 225 zero-padded to 2 lane-tiles (128-aligned slices)
KCOL = CIN * K1 * K1             # 27 im2col rows
KAUG = KCOL + 1                  # +1 ones-row carrying the conv bias
D_LIN = C * HP * WP              # 900
N_OUT = 10


# ------------------------------ fused Pallas kernel -------------------------------------
def make_fused_kernel(b_img):
    """Kernel for one batch-block of b_img images."""

    def kernel(p_ref, wc_ref, wl_ref, bl_ref, o_ref):
        # p_ref : (KAUG, b_img*Q*HW_PAD) bf16  im2col patches (+ ones row), lane-dense,
        #                                       lane index = ((img*Q + q)*256 + spatial)
        # wc_ref: (C, KAUG)              bf16  conv weight with bias appended as column
        # wl_ref: (C, HW_PAD, N_OUT)     bf16  linear weight, MXU-native, zero-padded rows
        # bl_ref: (1, N_OUT)             f32   linear bias
        # o_ref : (b_img, N_OUT)         f32   logits for this block (single dense store)

        # ---- conv as ONE wide matmul over the whole block (f32 accumulation) ----
        m = jnp.dot(wc_ref[...], p_ref[...],
                    preferred_element_type=jnp.float32)      # (C, b_img*Q*256)

        wl = wl_ref[...]                                     # (C, 256, 10)
        bl = bl_ref[...]                                     # (1, 10)

        rows = []
        for i in range(b_img):
            base = i * Q * HW_PAD
            # 2x2 max-pool == running max over the 4 pool-window offsets; slices are
            # 128-aligned 256-lane slabs (no lane shifts). relu(max(.)) == max(relu(.)).
            acc = m[:, base:base + HW_PAD]
            for q in range(1, Q):
                acc = jnp.maximum(acc, m[:, base + q * HW_PAD:
                                            base + (q + 1) * HW_PAD])
            pooled = jnp.maximum(acc, 0.0)                   # (C, 256) f32

            # ---- linear: MXU-native (1,256)@(256,10) per channel, f32 accumulation ----
            logit = bl                                        # (1, 10)
            for c in range(C):
                logit = logit + jnp.dot(
                    pooled[c:c + 1, :].astype(jnp.bfloat16),  # (1, 256)
                    wl[c],                                    # (256, 10)
                    preferred_element_type=jnp.float32)
            rows.append(logit)

        o_ref[...] = jnp.concatenate(rows, axis=0)            # one (b_img, 10) store

    return kernel


def fused_forward_call(patches, wc_aug, wl_perm, bl, n):
    # Batch-blocking: all images in one grid step at tiny n; >=8 images/block otherwise.
    # (Per review: cap the per-step block so double-buffered bf16 patch blocks stay well
    #  under VMEM on v7x (64 MiB); at ~114 KB per 8-image bf16 block there is huge slack,
    #  so no explicit vmem_limit_bytes is needed here.)
    b_img = n if n <= 8 else 8
    assert n % b_img == 0, "batch must be a multiple of the per-block image count"
    num_blocks = n // b_img
    lanes = b_img * Q * HW_PAD

    out = pl.pallas_call(
        make_fused_kernel(b_img),
        out_shape=jax.ShapeDtypeStruct((n, N_OUT), jnp.float32),
        grid=(num_blocks,),
        in_specs=[
            pl.BlockSpec((KAUG, lanes), lambda i: (0, i)),          # patches, lane-blocked
            pl.BlockSpec((C, KAUG), lambda i: (0, 0)),              # conv weight (+bias)
            pl.BlockSpec((C, HW_PAD, N_OUT), lambda i: (0, 0, 0)),  # linear weight
            pl.BlockSpec((1, N_OUT), lambda i: (0, 0)),             # linear bias
        ],
        out_specs=pl.BlockSpec((b_img, N_OUT), lambda i: (i, 0)),
        compiler_params=pltpu.CompilerParams(
            # single block -> one TC (megacore split of ~1us of work just adds sync);
            # with multiple real blocks, spread them over the 2 TCs on v7x.
            dimension_semantics=("parallel",) if num_blocks > 1 else ("arbitrary",)),
    )(patches, wc_aug, wl_perm, bl)
    return out


# ------------------------------- plain-JAX glue ------------------------------------------
def build_patches(x):
    """x: (n, CIN, H, W) f32 -> (KAUG, n*Q*HW_PAD) bf16, lane-dense, K order (cin,ki,kj)."""
    n = x.shape[0]
    shifted = [x[:, :, ki:ki + HO, kj:kj + WO]
               for ki in range(K1) for kj in range(K1)]
    cols = jnp.stack(shifted, axis=2)                         # (n, CIN, K1*K1, HO, WO)
    cols = cols.reshape(n, KCOL, HO, WO)                      # K order (cin, ki, kj)
    cols = cols[:, :, :HP * K2, :WP * K2]                     # pool crop (no-op at 32/3/2)
    cols = cols.reshape(n, KCOL, HP, K2, WP, K2)              # (n, K, hp, di, wp, dj)
    cols = jnp.transpose(cols, (0, 3, 5, 1, 2, 4))            # (n, di, dj, K, hp, wp)
    cols = cols.reshape(n, Q, KCOL, HW_P)                     # (n, q, 27, 225)
    ones = jnp.ones((n, Q, 1, HW_P), dtype=cols.dtype)        # bias row (append-ones)
    aug = jnp.concatenate([cols, ones], axis=2)               # (n, q, 28, 225)
    aug = jnp.pad(aug, ((0, 0), (0, 0), (0, 0), (0, HW_PAD - HW_P)))   # zero-pad -> 256
    aug = jnp.transpose(aug, (2, 0, 1, 3))                    # (28, n, q, 256)
    aug = aug.reshape(KAUG, n * Q * HW_PAD)                   # image-major, then q, then s
    return aug.astype(jnp.bfloat16)


def prepare_params(w_conv, b_conv, w_lin, b_lin):
    """One-time (outside the jitted forward) repack of the PyTorch-layout parameters."""
    wc_aug = jnp.concatenate(
        [w_conv.reshape(C, KCOL), b_conv.reshape(C, 1)], axis=1)          # (C, KAUG)
    # PyTorch flatten order of pooled NCHW is (c, hp, wp); make the linear weight
    # MXU-native per conv channel: (C, HW_P, N_OUT), zero-padded on the spatial axis
    # so padded lanes of the pooled activations contribute exactly zero.
    wl_perm = jnp.transpose(w_lin.reshape(N_OUT, C, HW_P), (1, 2, 0))     # (C, 225, 10)
    wl_perm = jnp.pad(wl_perm, ((0, 0), (0, HW_PAD - HW_P), (0, 0)))      # (C, 256, 10)
    bl = b_lin.reshape(1, N_OUT)
    return (wc_aug.astype(jnp.bfloat16),
            wl_perm.astype(jnp.bfloat16),
            bl.astype(jnp.float32))


@jax.jit
def modelc_forward(x, wc_aug, wl_perm, bl):
    """x: (n, 3, 32, 32) f32 NCHW; params pre-packed by prepare_params. -> (n, 10) f32."""
    patches = build_patches(x)
    return fused_forward_call(patches, wc_aug, wl_perm, bl, x.shape[0])


# ------------------------------ pure-JAX references -------------------------------------
def modelc_reference_f32(x, w_conv, b_conv, w_lin, b_lin):
    """Exact f32 semantics of the PyTorch module's forward()."""
    conv = lax.conv_general_dilated(x, w_conv, window_strides=(1, 1), padding='VALID',
                                    dimension_numbers=('NCHW', 'OIHW', 'NCHW'))
    conv = conv + b_conv[None, :, None, None]
    relu = jnp.maximum(conv, 0.0)
    mp = lax.reduce_window(relu, -jnp.inf, lax.max,
                           (1, 1, K2, K2), (1, 1, K2, K2), 'VALID')
    flat = mp.reshape(x.shape[0], -1)                         # PyTorch flatten(1) of NCHW
    return flat @ w_lin.T + b_lin


def modelc_reference_mixed(x, w_conv, b_conv, w_lin, b_lin):
    """Same math as the kernel: bf16 operands, f32 accumulation (tight check)."""
    conv = lax.conv_general_dilated(
        x.astype(jnp.bfloat16), w_conv.astype(jnp.bfloat16),
        window_strides=(1, 1), padding='VALID',
        dimension_numbers=('NCHW', 'OIHW', 'NCHW'),
        preferred_element_type=jnp.float32)
    conv = conv + b_conv.astype(jnp.bfloat16).astype(jnp.float32)[None, :, None, None]
    relu = jnp.maximum(conv, 0.0)
    mp = lax.reduce_window(relu, -jnp.inf, lax.max,
                           (1, 1, K2, K2), (1, 1, K2, K2), 'VALID')
    flat = mp.reshape(x.shape[0], -1).astype(jnp.bfloat16)
    logits = jnp.dot(flat, w_lin.astype(jnp.bfloat16).T,
                     preferred_element_type=jnp.float32)
    return logits + b_lin


# --------------------------------------- main --------------------------------------------
if __name__ == "__main__":
    key = jax.random.PRNGKey(0)
    kx, kw1, kb1, kw2, kb2 = jax.random.split(key, 5)

    # deterministic synthetic inputs/parameters (shapes follow ModelC(c=4, k1=3, k2=2))
    x = jax.random.normal(kx, (N, CIN, H, W), dtype=jnp.float32)
    w_conv = jax.random.normal(kw1, (C, CIN, K1, K1), dtype=jnp.float32) * 0.1
    b_conv = jax.random.normal(kb1, (C,), dtype=jnp.float32) * 0.1
    w_lin = jax.random.normal(kw2, (N_OUT, D_LIN), dtype=jnp.float32) * 0.05
    b_lin = jax.random.normal(kb2, (N_OUT,), dtype=jnp.float32) * 0.05

    # one-time parameter repack (hoisted out of the jitted forward)
    wc_aug, wl_perm, bl = prepare_params(w_conv, b_conv, w_lin, b_lin)

    logits = modelc_forward(x, wc_aug, wl_perm, bl)
    jax.block_until_ready(logits)
    assert logits.shape == (N, N_OUT)

    # tight check against a reference that uses the same bf16-operand / f32-accum math
    ref_mixed = modelc_reference_mixed(x, w_conv, b_conv, w_lin, b_lin)
    assert np.allclose(np.asarray(logits), np.asarray(ref_mixed), atol=1e-3, rtol=1e-3)

    # semantic sanity check against the full-f32 PyTorch-equivalent forward
    ref_f32 = modelc_reference_f32(x, w_conv, b_conv, w_lin, b_lin)
    assert np.allclose(np.asarray(logits), np.asarray(ref_f32), atol=5e-2, rtol=5e-2)

    # TODO(synk): FeedForward's cross_entropy loss and predict's argmax are training /
    #             inference glue outside forward() and are not part of the kernel.
    print("KERNEL_OK")
</pallas_src>

<mosaic_0001>
module attributes {stable_mosaic.version = 11 : i64} {
  func.func @kernel(%arg0: i32, %arg1: memref<28x2048xbf16, #tpu.memory_space<vmem>>, %arg2: memref<4x28xbf16, #tpu.memory_space<vmem>>, %arg3: memref<4x256x10xbf16, #tpu.memory_space<vmem>>, %arg4: memref<1x10xf32, #tpu.memory_space<vmem>>, %arg5: memref<2x10xf32, #tpu.memory_space<vmem>>) attributes {dimension_semantics = [#tpu.dimension_semantics<arbitrary>], iteration_bounds = array<i64: 1>, scalar_prefetch = 0 : i64, scratch_operands = 0 : i64, tpu.core_type = #tpu.core_type<tc>, window_params = [{transform_indices = @transform_0, window_bounds = array<i64: 28, 2048>}, {pipeline_mode = #tpu.pipeline_mode<synchronous>, transform_indices = @transform_1, window_bounds = array<i64: 4, 28>}, {pipeline_mode = #tpu.pipeline_mode<synchronous>, transform_indices = @transform_2, window_bounds = array<i64: 4, 256, 10>}, {pipeline_mode = #tpu.pipeline_mode<synchronous>, transform_indices = @transform_3, window_bounds = array<i64: 1, 10>}, {transform_indices = @transform_4, window_bounds = array<i64: 2, 10>}]} {
    %c0 = arith.constant 0 : index
    %c0_0 = arith.constant 0 : index
    %0 = vector.load %arg2[%c0, %c0_0] : memref<4x28xbf16, #tpu.memory_space<vmem>>, vector<4x28xbf16>
    %c0_1 = arith.constant 0 : index
    %c0_2 = arith.constant 0 : index
    %1 = vector.load %arg1[%c0_1, %c0_2] : memref<28x2048xbf16, #tpu.memory_space<vmem>>, vector<28x2048xbf16>
    %cst = arith.constant dense<0.000000e+00> : vector<4x2048xf32>
    %2 = tpu.matmul %0, %1, %cst {dimension_numbers = #tpu.dot_dimension_numbers<[1], [0], [0], [1], [0, 0, 1, 1], [], []>} : vector<4x28xbf16>, vector<28x2048xbf16>, vector<4x2048xf32> -> vector<4x2048xf32>
    %c0_3 = arith.constant 0 : index
    %c0_4 = arith.constant 0 : index
    %c0_5 = arith.constant 0 : index
    %3 = vector.load %arg3[%c0_3, %c0_4, %c0_5] : memref<4x256x10xbf16, #tpu.memory_space<vmem>>, vector<4x256x10xbf16>
    %c0_6 = arith.constant 0 : index
    %c0_7 = arith.constant 0 : index
    %4 = vector.load %arg4[%c0_6, %c0_7] : memref<1x10xf32, #tpu.memory_space<vmem>>, vector<1x10xf32>
    %5 = vector.extract_strided_slice %2 {offsets = [0, 0], sizes = [4, 256], strides = [1, 1]} : vector<4x2048xf32> to vector<4x256xf32>
    %6 = vector.extract_strided_slice %2 {offsets = [0, 256], sizes = [4, 256], strides = [1, 1]} : vector<4x2048xf32> to vector<4x256xf32>
    %7 = arith.maximumf %5, %6 : vector<4x256xf32>
    %8 = vector.extract_strided_slice %2 {offsets = [0, 512], sizes = [4, 256], strides = [1, 1]} : vector<4x2048xf32> to vector<4x256xf32>
    %9 = arith.maximumf %7, %8 : vector<4x256xf32>
    %10 = vector.extract_strided_slice %2 {offsets = [0, 768], sizes = [4, 256], strides = [1, 1]} : vector<4x2048xf32> to vector<4x256xf32>
    %11 = arith.maximumf %9, %10 : vector<4x256xf32>
    %cst_8 = arith.constant 0.000000e+00 : f32
    %12 = vector.broadcast %cst_8 : f32 to vector<4x256xf32>
    %13 = arith.maximumf %11, %12 : vector<4x256xf32>
    %14 = vector.extract_strided_slice %13 {offsets = [0, 0], sizes = [1, 256], strides = [1, 1]} : vector<4x256xf32> to vector<1x256xf32>
    %15 = arith.truncf %14 : vector<1x256xf32> to vector<1x256xbf16>
    %16 = vector.extract_strided_slice %3 {offsets = [0, 0, 0], sizes = [1, 256, 10], strides = [1, 1, 1]} : vector<4x256x10xbf16> to vector<1x256x10xbf16>
    %17 = vector.shape_cast %16 : vector<1x256x10xbf16> to vector<256x10xbf16>
    %cst_9 = arith.constant dense<0.000000e+00> : vector<1x10xf32>
    %18 = tpu.matmul %15, %17, %cst_9 {dimension_numbers = #tpu.dot_dimension_numbers<[1], [0], [0], [1], [0, 0, 1, 1], [], []>} : vector<1x256xbf16>, vector<256x10xbf16>, vector<1x10xf32> -> vector<1x10xf32>
    %19 = arith.addf %4, %18 : vector<1x10xf32>
    %20 = vector.extract_strided_slice %13 {offsets = [1, 0], sizes = [1, 256], strides = [1, 1]} : vector<4x256xf32> to vector<1x256xf32>
    %21 = arith.truncf %20 : vector<1x256xf32> to vector<1x256xbf16>
    %22 = vector.extract_strided_slice %3 {offsets = [1, 0, 0], sizes = [1, 256, 10], strides = [1, 1, 1]} : vector<4x256x10xbf16> to vector<1x256x10xbf16>
    %23 = vector.shape_cast %22 : vector<1x256x10xbf16> to vector<256x10xbf16>
    %cst_10 = arith.constant dense<0.000000e+00> : vector<1x10xf32>
    %24 = tpu.matmul %21, %23, %cst_10 {dimension_numbers = #tpu.dot_dimension_numbers<[1], [0], [0], [1], [0, 0, 1, 1], [], []>} : vector<1x256xbf16>, vector<256x10xbf16>, vector<1x10xf32> -> vector<1x10xf32>
    %25 = arith.addf %19, %24 : vector<1x10xf32>
    %26 = vector.extract_strided_slice %13 {offsets = [2, 0], sizes = [1, 256], strides = [1, 1]} : vector<4x256xf32> to vector<1x256xf32>
    %27 = arith.truncf %26 : vector<1x256xf32> to vector<1x256xbf16>
    %28 = vector.extract_strided_slice %3 {offsets = [2, 0, 0], sizes = [1, 256, 10], strides = [1, 1, 1]} : vector<4x256x10xbf16> to vector<1x256x10xbf16>
    %29 = vector.shape_cast %28 : vector<1x256x10xbf16> to vector<256x10xbf16>
    %cst_11 = arith.constant dense<0.000000e+00> : vector<1x10xf32>
    %30 = tpu.matmul %27, %29, %cst_11 {dimension_numbers = #tpu.dot_dimension_numbers<[1], [0], [0], [1], [0, 0, 1, 1], [], []>} : vector<1x256xbf16>, vector<256x10xbf16>, vector<1x10xf32> -> vector<1x10xf32>
    %31 = arith.addf %25, %30 : vector<1x10xf32>
    %32 = vector.extract_strided_slice %13 {offsets = [3, 0], sizes = [1, 256], strides = [1, 1]} : vector<4x256xf32> to vector<1x256xf32>
    %33 = arith.truncf %32 : vector<1x256xf32> to vector<1x256xbf16>
    %34 = vector.extract_strided_slice %3 {offsets = [3, 0, 0], sizes = [1, 256, 10], strides = [1, 1, 1]} : vector<4x256x10xbf16> to vector<1x256x10xbf16>
    %35 = vector.shape_cast %34 : vector<1x256x10xbf16> to vector<256x10xbf16>
    %cst_12 = arith.constant dense<0.000000e+00> : vector<1x10xf32>
    %36 = tpu.matmul %33, %35, %cst_12 {dimension_numbers = #tpu.dot_dimension_numbers<[1], [0], [0], [1], [0, 0, 1, 1], [], []>} : vector<1x256xbf16>, vector<256x10xbf16>, vector<1x10xf32> -> vector<1x10xf32>
    %37 = arith.addf %31, %36 : vector<1x10xf32>
    %38 = vector.extract_strided_slice %2 {offsets = [0, 1024], sizes = [4, 256], strides = [1, 1]} : vector<4x2048xf32> to vector<4x256xf32>
    %39 = vector.extract_strided_slice %2 {offsets = [0, 1280], sizes = [4, 256], strides = [1, 1]} : vector<4x2048xf32> to vector<4x256xf32>
    %40 = arith.maximumf %38, %39 : vector<4x256xf32>
    %41 = vector.extract_strided_slice %2 {offsets = [0, 1536], sizes = [4, 256], strides = [1, 1]} : vector<4x2048xf32> to vector<4x256xf32>
    %42 = arith.maximumf %40, %41 : vector<4x256xf32>
    %43 = vector.extract_strided_slice %2 {offsets = [0, 1792], sizes = [4, 256], strides = [1, 1]} : vector<4x2048xf32> to vector<4x256xf32>
    %44 = arith.maximumf %42, %43 : vector<4x256xf32>
    %cst_13 = arith.constant 0.000000e+00 : f32
    %45 = vector.broadcast %cst_13 : f32 to vector<4x256xf32>
    %46 = arith.maximumf %44, %45 : vector<4x256xf32>
    %47 = vector.extract_strided_slice %46 {offsets = [0, 0], sizes = [1, 256], strides = [1, 1]} : vector<4x256xf32> to vector<1x256xf32>
    %48 = arith.truncf %47 : vector<1x256xf32> to vector<1x256xbf16>
    %49 = vector.extract_strided_slice %3 {offsets = [0, 0, 0], sizes = [1, 256, 10], strides = [1, 1, 1]} : vector<4x256x10xbf16> to vector<1x256x10xbf16>
    %50 = vector.shape_cast %49 : vector<1x256x10xbf16> to vector<256x10xbf16>
    %cst_14 = arith.constant dense<0.000000e+00> : vector<1x10xf32>
    %51 = tpu.matmul %48, %50, %cst_14 {dimension_numbers = #tpu.dot_dimension_numbers<[1], [0], [0], [1], [0, 0, 1, 1], [], []>} : vector<1x256xbf16>, vector<256x10xbf16>, vector<1x10xf32> -> vector<1x10xf32>
    %52 = arith.addf %4, %51 : vector<1x10xf32>
    %53 = vector.extract_strided_slice %46 {offsets = [1, 0], sizes = [1, 256], strides = [1, 1]} : vector<4x256xf32> to vector<1x256xf32>
    %54 = arith.truncf %53 : vector<1x256xf32> to vector<1x256xbf16>
    %55 = vector.extract_strided_slice %3 {offsets = [1, 0, 0], sizes = [1, 256, 10], strides = [1, 1, 1]} : vector<4x256x10xbf16> to vector<1x256x10xbf16>
    %56 = vector.shape_cast %55 : vector<1x256x10xbf16> to vector<256x10xbf16>
    %cst_15 = arith.constant dense<0.000000e+00> : vector<1x10xf32>
    %57 = tpu.matmul %54, %56, %cst_15 {dimension_numbers = #tpu.dot_dimension_numbers<[1], [0], [0], [1], [0, 0, 1, 1], [], []>} : vector<1x256xbf16>, vector<256x10xbf16>, vector<1x10xf32> -> vector<1x10xf32>
    %58 = arith.addf %52, %57 : vector<1x10xf32>
    %59 = vector.extract_strided_slice %46 {offsets = [2, 0], sizes = [1, 256], strides = [1, 1]} : vector<4x256xf32> to vector<1x256xf32>
    %60 = arith.truncf %59 : vector<1x256xf32> to vector<1x256xbf16>
    %61 = vector.extract_strided_slice %3 {offsets = [2, 0, 0], sizes = [1, 256, 10], strides = [1, 1, 1]} : vector<4x256x10xbf16> to vector<1x256x10xbf16>
    %62 = vector.shape_cast %61 : vector<1x256x10xbf16> to vector<256x10xbf16>
    %cst_16 = arith.constant dense<0.000000e+00> : vector<1x10xf32>
    %63 = tpu.matmul %60, %62, %cst_16 {dimension_numbers = #tpu.dot_dimension_numbers<[1], [0], [0], [1], [0, 0, 1, 1], [], []>} : vector<1x256xbf16>, vector<256x10xbf16>, vector<1x10xf32> -> vector<1x10xf32>
    %64 = arith.addf %58, %63 : vector<1x10xf32>
    %65 = vector.extract_strided_slice %46 {offsets = [3, 0], sizes = [1, 256], strides = [1, 1]} : vector<4x256xf32> to vector<1x256xf32>
    %66 = arith.truncf %65 : vector<1x256xf32> to vector<1x256xbf16>
    %67 = vector.extract_strided_slice %3 {offsets = [3, 0, 0], sizes = [1, 256, 10], strides = [1, 1, 1]} : vector<4x256x10xbf16> to vector<1x256x10xbf16>
    %68 = vector.shape_cast %67 : vector<1x256x10xbf16> to vector<256x10xbf16>
    %cst_17 = arith.constant dense<0.000000e+00> : vector<1x10xf32>
    %69 = tpu.matmul %66, %68, %cst_17 {dimension_numbers = #tpu.dot_dimension_numbers<[1], [0], [0], [1], [0, 0, 1, 1], [], []>} : vector<1x256xbf16>, vector<256x10xbf16>, vector<1x10xf32> -> vector<1x10xf32>
    %70 = arith.addf %64, %69 : vector<1x10xf32>
    %71 = tpu.concatenate %37, %70 in 0 : vector<1x10xf32>, vector<1x10xf32> -> vector<2x10xf32>
    %c0_18 = arith.constant 0 : index
    %c0_19 = arith.constant 0 : index
    %72 = vector.load %arg5[%c0_18, %c0_19] : memref<2x10xf32, #tpu.memory_space<vmem>>, vector<2x10xf32>
    tpu.vector_store %arg5[%c0_18, %c0_19], %71 {strides = array<i32>} : memref<2x10xf32, #tpu.memory_space<vmem>>, vector<2x10xf32>,
    return
  }
  func.func @transform_0(%arg0: i32) -> (i32, i32) {
    %c0_i32 = arith.constant 0 : i32
    %c0_i32_0 = arith.constant 0 : i32
    return %c0_i32, %arg0 : i32, i32
  }
  func.func @transform_1(%arg0: i32) -> (i32, i32) {
    %c0_i32 = arith.constant 0 : i32
    %c0_i32_0 = arith.constant 0 : i32
    %c0_i32_1 = arith.constant 0 : i32
    return %c0_i32, %c0_i32_0 : i32, i32
  }
  func.func @transform_2(%arg0: i32) -> (i32, i32, i32) {
    %c0_i32 = arith.constant 0 : i32
    %c0_i32_0 = arith.constant 0 : i32
    %c0_i32_1 = arith.constant 0 : i32
    %c0_i32_2 = arith.constant 0 : i32
    return %c0_i32, %c0_i32_0, %c0_i32_1 : i32, i32, i32
  }
  func.func @transform_3(%arg0: i32) -> (i32, i32) {
    %c0_i32 = arith.constant 0 : i32
    %c0_i32_0 = arith.constant 0 : i32
    %c0_i32_1 = arith.constant 0 : i32
    return %c0_i32, %c0_i32_0 : i32, i32
  }
  func.func @transform_4(%arg0: i32) -> (i32, i32) {
    %c0_i32 = arith.constant 0 : i32
    %c0_i32_0 = arith.constant 0 : i32
    return %arg0, %c0_i32 : i32, i32
  }
}

</mosaic_0001>

<llo_original>
// kernel: modelc_forward.1
$region0: #{modelc_forward.1}
  #allocation0 [shape = 'u32[]', space=smem, size = 0x4, offset = 0x4, fixed_abs, tag = 'smem constant byte address 0x4 - core index']
  #allocation1 [shape = 'u32[144,128]{1,0:T(1,128)}', space=vmem, size = 0x12000, scoped, tag = 'internal scratch']
  %s0 = inlined_call_operand.vmem [shape: bf16[28,2048], index: 0, kind: input, shape index: {}]
  %s1 = inlined_call_operand.vmem [shape: bf16[4,28], index: 1, kind: input, shape index: {}]
  %s2 = inlined_call_operand.vmem [shape: bf16[4,256,10], index: 2, kind: input, shape index: {}]
  %s3 = inlined_call_operand.vmem [shape: f32[1,10], index: 3, kind: input, shape index: {}]
  %s4 = inlined_call_operand.hbm [shape: f32[2,10], index: 4, kind: output, shape index: {}]
  %s5 = sld [smem:[#allocation0]]
  $region26: #{modelc_forward.1} parent=0
    _
  %s7 = ssub.s32 1, %s5
  %s8 = scalar_select 0, %s7, %s5
  $region1: #{modelc_forward.1} parent=0
    #allocation2 [shape = 'u8[1024]{0}', space=vmem, size = 0x400, scoped, tag = 'output window, operand 0, single buffered']
    #allocation3 [shape = 's32[1]{0}', space=sflag, size = 0x4, scoped, tag = 'scoped memory for modelc_forward.1']
    %9 = vsyncpa [#allocation3], 0
    // Predicated region
    $region2: #{modelc_forward.1} parent=1 // pred_check
      _
    $region3: #{modelc_forward.1} parent=1 // pred_check_branch
      %11 = sbr.rel (0) target = $region5
    $region4: #{modelc_forward.1} parent=1 // pred_region
      _
    $region5: #{modelc_forward.1} parent=1 // pred_fallthru
      _
    // Predicated region
    $region6: #{modelc_forward.1} parent=1 // pred_check
      _
    $region7: #{modelc_forward.1} parent=1 // pred_check_branch
      %13 = sbr.rel (0) target = $region9
    $region8: #{modelc_forward.1} parent=1 // pred_region
      _
    $region9: #{modelc_forward.1} parent=1 // pred_fallthru
      _
    // Predicated region
    $region10: #{modelc_forward.1} parent=1 // pred_check
      _
    $region11: #{modelc_forward.1} parent=1 // pred_check_branch
      %15 = sbr.rel (0) target = $region13
    $region12: #{modelc_forward.1} parent=1 // pred_region
      _
    $region13: #{modelc_forward.1} parent=1 // pred_fallthru
      _
    // Predicated region
    $region14: #{modelc_forward.1} parent=1 // pred_check
      _
    $region15: #{modelc_forward.1} parent=1 // pred_check_branch
      %17 = sbr.rel (0) target = $region17
    $region16: #{modelc_forward.1} parent=1 // pred_region
      _
    $region17: #{modelc_forward.1} parent=1 // pred_fallthru
      _
    %v19 = vld [vmem:[%s1] sm:$0x3]
    %v20 = vld [vmem:[%s0] sm:$0xff]
    %v21 = vld [vmem:[%s0 + $0x8] sm:$0xff]
    %v22 = vld [vmem:[%s0 + $0x10] sm:$0xff]
    %v23 = vld [vmem:[%s0 + $0x18] sm:$0xff]
    %v24 = vld [vmem:[%s0 + $0x20] sm:$0xff]
    %v25 = vld [vmem:[%s0 + $0x28] sm:$0xff]
    %v26 = vld [vmem:[%s0 + $0x30] sm:$0xff]
    %v27 = vld [vmem:[%s0 + $0x38] sm:$0xff]
    %v28 = vld [vmem:[%s0 + $0x40] sm:$0xff]
    %v29 = vld [vmem:[%s0 + $0x48] sm:$0xff]
    %v30 = vld [vmem:[%s0 + $0x50] sm:$0xff]
    %v31 = vld [vmem:[%s0 + $0x58] sm:$0xff]
    %v32 = vld [vmem:[%s0 + $0x60] sm:$0xff]
    %v33 = vld [vmem:[%s0 + $0x68] sm:$0xff]
    %v34 = vld [vmem:[%s0 + $0x70] sm:$0xff]
    %v35 = vld [vmem:[%s0 + $0x78] sm:$0xff]
    %v36 = vld [vmem:[%s0 + $0x80] sm:$0xff]
    %v37 = vld [vmem:[%s0 + $0x88] sm:$0xff]
    %v38 = vld [vmem:[%s0 + $0x90] sm:$0xff]
    %v39 = vld [vmem:[%s0 + $0x98] sm:$0xff]
    %v40 = vld [vmem:[%s0 + $0xa0] sm:$0xff]
    %v41 = vld [vmem:[%s0 + $0xa8] sm:$0xff]
    %v42 = vld [vmem:[%s0 + $0xb0] sm:$0xff]
    %v43 = vld [vmem:[%s0 + $0xb8] sm:$0xff]
    %v44 = vld [vmem:[%s0 + $0xc0] sm:$0x33]
    %v45 = vld [vmem:[%s0 + $0xc8] sm:$0x33]
    %v46 = vld [vmem:[%s0 + $0xd0] sm:$0x33]
    %v47 = vld [vmem:[%s0 + $0xd8] sm:$0x33]
    %v48 = vld [vmem:[%s0 + $0xe0] sm:$0x33]
    %v49 = vld [vmem:[%s0 + $0xe8] sm:$0x33]
    %v50 = vld [vmem:[%s0 + $0xf0] sm:$0x33]
    %v51 = vld [vmem:[%s0 + $0xf8] sm:$0x33]
    %v84 = vunpack.c.l.b16 %v20
    %v85 = vunpack.c.h.b16 %v20
    %v86 = vunpack.c.l.b16 %v21
    %v87 = vunpack.c.h.b16 %v21
    %v88 = vunpack.c.l.b16 %v22
    %v89 = vunpack.c.h.b16 %v22
    %v90 = vunpack.c.l.b16 %v23
    %v91 = vunpack.c.h.b16 %v23
    %v92 = vunpack.c.l.b16 %v24
    %v93 = vunpack.c.h.b16 %v24
    %v94 = vunpack.c.l.b16 %v25
    %v95 = vunpack.c.h.b16 %v25
    %v96 = vunpack.c.l.b16 %v26
    %v97 = vunpack.c.h.b16 %v26
    %v98 = vunpack.c.l.b16 %v27
    %v99 = vunpack.c.h.b16 %v27
    %v100 = vunpack.c.l.b16 %v28
    %v101 = vunpack.c.h.b16 %v28
    %v102 = vunpack.c.l.b16 %v29
    %v103 = vunpack.c.h.b16 %v29
    %v104 = vunpack.c.l.b16 %v30
    %v105 = vunpack.c.h.b16 %v30
    %v106 = vunpack.c.l.b16 %v31
    %v107 = vunpack.c.h.b16 %v31
    %v108 = vunpack.c.l.b16 %v32
    %v109 = vunpack.c.h.b16 %v32
    %v110 = vunpack.c.l.b16 %v33
    %v111 = vunpack.c.h.b16 %v33
    %v112 = vunpack.c.l.b16 %v34
    %v113 = vunpack.c.h.b16 %v34
    %v114 = vunpack.c.l.b16 %v35
    %v115 = vunpack.c.h.b16 %v35
    %v116 = vunpack.c.l.b16 %v36
    %v117 = vunpack.c.h.b16 %v36
    %v118 = vunpack.c.l.b16 %v37
    %v119 = vunpack.c.h.b16 %v37
    %v120 = vunpack.c.l.b16 %v38
    %v121 = vunpack.c.h.b16 %v38
    %v122 = vunpack.c.l.b16 %v39
    %v123 = vunpack.c.h.b16 %v39
    %v124 = vunpack.c.l.b16 %v40
    %v125 = vunpack.c.h.b16 %v40
    %v126 = vunpack.c.l.b16 %v41
    %v127 = vunpack.c.h.b16 %v41
    %v128 = vunpack.c.l.b16 %v42
    %v129 = vunpack.c.h.b16 %v42
    %v130 = vunpack.c.l.b16 %v43
    %v131 = vunpack.c.h.b16 %v43
    %v132 = vunpack.c.l.b16 %v44
    %v133 = vunpack.c.h.b16 %v44
    %v134 = vunpack.c.l.b16 %v45
    %v135 = vunpack.c.h.b16 %v45
    %v136 = vunpack.c.l.b16 %v46
    %v137 = vunpack.c.h.b16 %v46
    %v138 = vunpack.c.l.b16 %v47
    %v139 = vunpack.c.h.b16 %v47
    %v140 = vunpack.c.l.b16 %v48
    %v141 = vunpack.c.h.b16 %v48
    %v142 = vunpack.c.l.b16 %v49
    %v143 = vunpack.c.h.b16 %v49
    %v144 = vunpack.c.l.b16 %v50
    %v145 = vunpack.c.h.b16 %v50
    %v146 = vunpack.c.l.b16 %v51
    %v147 = vunpack.c.h.b16 %v51
    %v148 = vpack.c.b16 %v100, %v84
    %v149 = vpack.c.b16 %v101, %v85
    %v150 = vpack.c.b16 %v102, %v86
    %v151 = vpack.c.b16 %v103, %v87
    %v152 = vpack.c.b16 %v104, %v88
    %v153 = vpack.c.b16 %v105, %v89
    %v154 = vpack.c.b16 %v106, %v90
    %v155 = vpack.c.b16 %v107, %v91
    %v156 = vpack.c.b16 %v108, %v92
    %v157 = vpack.c.b16 %v109, %v93
    %v158 = vpack.c.b16 %v110, %v94
    %v159 = vpack.c.b16 %v111, %v95
    %v160 = vpack.c.b16 %v112, %v96
    %v161 = vpack.c.b16 %v113, %v97
    %v162 = vpack.c.b16 %v114, %v98
    %v163 = vpack.c.b16 %v115, %v99
    %v164 = vpack.c.b16 %v132, %v116
    %v165 = vpack.c.b16 %v133, %v117
    %v166 = vpack.c.b16 %v134, %v118
    %v167 = vpack.c.b16 %v135, %v119
    %v168 = vpack.c.b16 %v136, %v120
    %v169 = vpack.c.b16 %v137, %v121
    %v170 = vpack.c.b16 %v138, %v122
    %v171 = vpack.c.b16 %v139, %v123
    %v172 = vpack.c.b16 %v140, %v124
    %v173 = vpack.c.b16 %v141, %v125
    %v174 = vpack.c.b16 %v142, %v126
    %v175 = vpack.c.b16 %v143, %v127
    %v176 = vpack.c.b16 %v144, %v128
    %v177 = vpack.c.b16 %v145, %v129
    %v178 = vpack.c.b16 %v146, %v130
    %v179 = vpack.c.b16 %v147, %v131
    %vm196 = vcmask 228352
    %v198 = vsel %vm196, %v19, 0
    %vm200 = vcmask 1045504
    %v202 = vsel %vm200, %v164, 0
    %v205 = vsel %vm200, %v165, 0
    %v208 = vsel %vm200, %v166, 0
    %v211 = vsel %vm200, %v167, 0
    %v214 = vsel %vm200, %v168, 0
    %v217 = vsel %vm200, %v169, 0
    %v220 = vsel %vm200, %v170, 0
    %v223 = vsel %vm200, %v171, 0
    %v226 = vsel %vm200, %v172, 0
    %v229 = vsel %vm200, %v173, 0
    %v232 = vsel %vm200, %v174, 0
    %v235 = vsel %vm200, %v175, 0
    %v238 = vsel %vm200, %v176, 0
    %v241 = vsel %vm200, %v177, 0
    %v244 = vsel %vm200, %v178, 0
    %v247 = vsel %vm200, %v179, 0
    %249 = vmatprep.subr.bf16.mxu0 0
    %250 = vmatpush1.bf16.msra.mxu0 0
    %251 = vmatprep.subr.bf16.mxu0 0
    %252 = vmatpush1.bf16.msra.mxu0 0
    %253 = vmatprep.subr.bf16.mxu0 0
    %254 = vmatpush1.bf16.msra.mxu0 0
    %255 = vmatprep.subr.bf16.mxu0 0
    %256 = vmatpush1.bf16.msra.mxu0 0
    %257 = vmatprep.subr.bf16.mxu0 0
    %258 = vmatpush1.bf16.msra.mxu0 0
    %259 = vmatprep.subr.bf16.mxu0 0
    %260 = vmatpush1.bf16.msra.mxu0 0
    %261 = vmatprep.subr.bf16.mxu0 %v205
    %262 = vmatpush1.bf16.msra.mxu0 %v202
    %263 = vmatprep.subr.bf16.mxu0 %v149
    %264 = vmatpush1.bf16.msra.mxu0 %v148
    %265 = vmatprep.subr.bf16.mxu0 0
    %266 = vmatpush2.bf16.msra.mxu0 0
    %267 = vmatprep.subr.bf16.mxu0 0
    %268 = vmatpush2.bf16.msra.mxu0 0
    %269 = vmatprep.subr.bf16.mxu0 0
    %270 = vmatpush2.bf16.msra.mxu0 0
    %271 = vmatprep.subr.bf16.mxu0 0
    %272 = vmatpush2.bf16.msra.mxu0 0
    %273 = vmatprep.subr.bf16.mxu0 0
    %274 = vmatpush2.bf16.msra.mxu0 0
    %275 = vmatprep.subr.bf16.mxu0 0
    %276 = vmatpush2.bf16.msra.mxu0 0
    %277 = vmatprep.subr.bf16.mxu0 0
    %278 = vmatpush2.bf16.msra.mxu0 0
    %279 = vmatprep.subr.bf16.mxu0 0
    %280 = vmatpush2.bf16.msra.mxu0 0
    %281 = vmatprep.mubr.bf16.mxu0 0
    %282 = vmatmul.mubr.bf16.gmra.mxu0 %v198
    %v283 = vpop.f32.mrf.mxu0
    %v284 = vadd.f32 0.0, %v283
    %v285 = vpop.f32.mrf.mxu0
    %v286 = vadd.f32 0.0, %v285
    %v287 = vpop.f32.mrf.mxu0
    %v288 = vpop.f32.mrf.mxu0
    %289 = vdwg.mxu0
    %290 = vmatprep.subr.bf16.mxu0 0
    %291 = vmatpush1.bf16.msra.mxu0 0
    %292 = vmatprep.subr.bf16.mxu0 0
    %293 = vmatpush1.bf16.msra.mxu0 0
    %294 = vmatprep.subr.bf16.mxu0 0
    %295 = vmatpush1.bf16.msra.mxu0 0
    %296 = vmatprep.subr.bf16.mxu0 0
    %297 = vmatpush1.bf16.msra.mxu0 0
    %298 = vmatprep.subr.bf16.mxu0 0
    %299 = vmatpush1.bf16.msra.mxu0 0
    %300 = vmatprep.subr.bf16.mxu0 0
    %301 = vmatpush1.bf16.msra.mxu0 0
    %302 = vmatprep.subr.bf16.mxu0 %v211
    %303 = vmatpush1.bf16.msra.mxu0 %v208
    %304 = vmatprep.subr.bf16.mxu0 %v151
    %305 = vmatpush1.bf16.msra.mxu0 %v150
    %306 = vmatprep.subr.bf16.mxu0 0
    %307 = vmatpush2.bf16.msra.mxu0 0
    %308 = vmatprep.subr.bf16.mxu0 0
    %309 = vmatpush2.bf16.msra.mxu0 0
    %310 = vmatprep.subr.bf16.mxu0 0
    %311 = vmatpush2.bf16.msra.mxu0 0
    %312 = vmatprep.subr.bf16.mxu0 0
    %313 = vmatpush2.bf16.msra.mxu0 0
    %314 = vmatprep.subr.bf16.mxu0 0
    %315 = vmatpush2.bf16.msra.mxu0 0
    %316 = vmatprep.subr.bf16.mxu0 0
    %317 = vmatpush2.bf16.msra.mxu0 0
    %318 = vmatprep.subr.bf16.mxu0 0
    %319 = vmatpush2.bf16.msra.mxu0 0
    %320 = vmatprep.subr.bf16.mxu0 0
    %321 = vmatpush2.bf16.msra.mxu0 0
    %322 = vmatprep.mubr.bf16.mxu0 0
    %323 = vmatmul.mubr.bf16.gmra.mxu0 %v198
    %v324 = vpop.f32.mrf.mxu0
    %v325 = vadd.f32 0.0, %v324
    %v326 = vpop.f32.mrf.mxu0
    %v327 = vadd.f32 0.0, %v326
    %v328 = vpop.f32.mrf.mxu0
    %v329 = vpop.f32.mrf.mxu0
    %330 = vdwg.mxu0
    %331 = vmatprep.subr.bf16.mxu0 0
    %332 = vmatpush1.bf16.msra.mxu0 0
    %333 = vmatprep.subr.bf16.mxu0 0
    %334 = vmatpush1.bf16.msra.mxu0 0
    %335 = vmatprep.subr.bf16.mxu0 0
    %336 = vmatpush1.bf16.msra.mxu0 0
    %337 = vmatprep.subr.bf16.mxu0 0
    %338 = vmatpush1.bf16.msra.mxu0 0
    %339 = vmatprep.subr.bf16.mxu0 0
    %340 = vmatpush1.bf16.msra.mxu0 0
    %341 = vmatprep.subr.bf16.mxu0 0
    %342 = vmatpush1.bf16.msra.mxu0 0
    %343 = vmatprep.subr.bf16.mxu0 %v217
    %344 = vmatpush1.bf16.msra.mxu0 %v214
    %345 = vmatprep.subr.bf16.mxu0 %v153
    %346 = vmatpush1.bf16.msra.mxu0 %v152
    %347 = vmatprep.subr.bf16.mxu0 0
    %348 = vmatpush2.bf16.msra.mxu0 0
    %349 = vmatprep.subr.bf16.mxu0 0
    %350 = vmatpush2.bf16.msra.mxu0 0
    %351 = vmatprep.subr.bf16.mxu0 0
    %352 = vmatpush2.bf16.msra.mxu0 0
    %353 = vmatprep.subr.bf16.mxu0 0
    %354 = vmatpush2.bf16.msra.mxu0 0
    %355 = vmatprep.subr.bf16.mxu0 0
    %356 = vmatpush2.bf16.msra.mxu0 0
    %357 = vmatprep.subr.bf16.mxu0 0
    %358 = vmatpush2.bf16.msra.mxu0 0
    %359 = vmatprep.subr.bf16.mxu0 0
    %360 = vmatpush2.bf16.msra.mxu0 0
    %361 = vmatprep.subr.bf16.mxu0 0
    %362 = vmatpush2.bf16.msra.mxu0 0
    %363 = vmatprep.mubr.bf16.mxu0 0
    %364 = vmatmul.mubr.bf16.gmra.mxu0 %v198
    %v365 = vpop.f32.mrf.mxu0
    %v366 = vadd.f32 0.0, %v365
    %v367 = vpop.f32.mrf.mxu0
    %v368 = vadd.f32 0.0, %v367
    %v369 = vpop.f32.mrf.mxu0
    %v370 = vpop.f32.mrf.mxu0
    %371 = vdwg.mxu0
    %372 = vmatprep.subr.bf16.mxu0 0
    %373 = vmatpush1.bf16.msra.mxu0 0
    %374 = vmatprep.subr.bf16.mxu0 0
    %375 = vmatpush1.bf16.msra.mxu0 0
    %376 = vmatprep.subr.bf16.mxu0 0
    %377 = vmatpush1.bf16.msra.mxu0 0
    %378 = vmatprep.subr.bf16.mxu0 0
    %379 = vmatpush1.bf16.msra.mxu0 0
    %380 = vmatprep.subr.bf16.mxu0 0
    %381 = vmatpush1.bf16.msra.mxu0 0
    %382 = vmatprep.subr.bf16.mxu0 0
    %383 = vmatpush1.bf16.msra.mxu0 0
    %384 = vmatprep.subr.bf16.mxu0 %v223
    %385 = vmatpush1.bf16.msra.mxu0 %v220
    %386 = vmatprep.subr.bf16.mxu0 %v155
    %387 = vmatpush1.bf16.msra.mxu0 %v154
    %388 = vmatprep.subr.bf16.mxu0 0
    %389 = vmatpush2.bf16.msra.mxu0 0
    %390 = vmatprep.subr.bf16.mxu0 0
    %391 = vmatpush2.bf16.msra.mxu0 0
    %392 = vmatprep.subr.bf16.mxu0 0
    %393 = vmatpush2.bf16.msra.mxu0 0
    %394 = vmatprep.subr.bf16.mxu0 0
    %395 = vmatpush2.bf16.msra.mxu0 0
    %396 = vmatprep.subr.bf16.mxu0 0
    %397 = vmatpush2.bf16.msra.mxu0 0
    %398 = vmatprep.subr.bf16.mxu0 0
    %399 = vmatpush2.bf16.msra.mxu0 0
    %400 = vmatprep.subr.bf16.mxu0 0
    %401 = vmatpush2.bf16.msra.mxu0 0
    %402 = vmatprep.subr.bf16.mxu0 0
    %403 = vmatpush2.bf16.msra.mxu0 0
    %404 = vmatprep.mubr.bf16.mxu0 0
    %405 = vmatmul.mubr.bf16.gmra.mxu0 %v198
    %v406 = vpop.f32.mrf.mxu0
    %v407 = vadd.f32 0.0, %v406
    %v408 = vpop.f32.mrf.mxu0
    %v409 = vadd.f32 0.0, %v408
    %v410 = vpop.f32.mrf.mxu0
    %v411 = vpop.f32.mrf.mxu0
    %412 = vdwg.mxu0
    %413 = vmatprep.subr.bf16.mxu0 0
    %414 = vmatpush1.bf16.msra.mxu0 0
    %415 = vmatprep.subr.bf16.mxu0 0
    %416 = vmatpush1.bf16.msra.mxu0 0
    %417 = vmatprep.subr.bf16.mxu0 0
    %418 = vmatpush1.bf16.msra.mxu0 0
    %419 = vmatprep.subr.bf16.mxu0 0
    %420 = vmatpush1.bf16.msra.mxu0 0
    %421 = vmatprep.subr.bf16.mxu0 0
    %422 = vmatpush1.bf16.msra.mxu0 0
    %423 = vmatprep.subr.bf16.mxu0 0
    %424 = vmatpush1.bf16.msra.mxu0 0
    %425 = vmatprep.subr.bf16.mxu0 %v229
    %426 = vmatpush1.bf16.msra.mxu0 %v226
    %427 = vmatprep.subr.bf16.mxu0 %v157
    %428 = vmatpush1.bf16.msra.mxu0 %v156
    %429 = vmatprep.subr.bf16.mxu0 0
    %430 = vmatpush2.bf16.msra.mxu0 0
    %431 = vmatprep.subr.bf16.mxu0 0
    %432 = vmatpush2.bf16.msra.mxu0 0
    %433 = vmatprep.subr.bf16.mxu0 0
    %434 = vmatpush2.bf16.msra.mxu0 0
    %435 = vmatprep.subr.bf16.mxu0 0
    %436 = vmatpush2.bf16.msra.mxu0 0
    %437 = vmatprep.subr.bf16.mxu0 0
    %438 = vmatpush2.bf16.msra.mxu0 0
    %439 = vmatprep.subr.bf16.mxu0 0
    %440 = vmatpush2.bf16.msra.mxu0 0
    %441 = vmatprep.subr.bf16.mxu0 0
    %442 = vmatpush2.bf16.msra.mxu0 0
    %443 = vmatprep.subr.bf16.mxu0 0
    %444 = vmatpush2.bf16.msra.mxu0 0
    %445 = vmatprep.mubr.bf16.mxu0 0
    %446 = vmatmul.mubr.bf16.gmra.mxu0 %v198
    %v447 = vpop.f32.mrf.mxu0
    %v448 = vadd.f32 0.0, %v447
    %v449 = vpop.f32.mrf.mxu0
    %v450 = vadd.f32 0.0, %v449
    %v451 = vpop.f32.mrf.mxu0
    %v452 = vpop.f32.mrf.mxu0
    %453 = vdwg.mxu0
    %454 = vmatprep.subr.bf16.mxu0 0
    %455 = vmatpush1.bf16.msra.mxu0 0
    %456 = vmatprep.subr.bf16.mxu0 0
    %457 = vmatpush1.bf16.msra.mxu0 0
    %458 = vmatprep.subr.bf16.mxu0 0
    %459 = vmatpush1.bf16.msra.mxu0 0
    %460 = vmatprep.subr.bf16.mxu0 0
    %461 = vmatpush1.bf16.msra.mxu0 0
    %462 = vmatprep.subr.bf16.mxu0 0
    %463 = vmatpush1.bf16.msra.mxu0 0
    %464 = vmatprep.subr.bf16.mxu0 0
    %465 = vmatpush1.bf16.msra.mxu0 0
    %466 = vmatprep.subr.bf16.mxu0 %v235
    %467 = vmatpush1.bf16.msra.mxu0 %v232
    %468 = vmatprep.subr.bf16.mxu0 %v159
    %469 = vmatpush1.bf16.msra.mxu0 %v158
    %470 = vmatprep.subr.bf16.mxu0 0
    %471 = vmatpush2.bf16.msra.mxu0 0
    %472 = vmatprep.subr.bf16.mxu0 0
    %473 = vmatpush2.bf16.msra.mxu0 0
    %474 = vmatprep.subr.bf16.mxu0 0
    %475 = vmatpush2.bf16.msra.mxu0 0
    %476 = vmatprep.subr.bf16.mxu0 0
    %477 = vmatpush2.bf16.msra.mxu0 0
    %478 = vmatprep.subr.bf16.mxu0 0
    %479 = vmatpush2.bf16.msra.mxu0 0
    %480 = vmatprep.subr.bf16.mxu0 0
    %481 = vmatpush2.bf16.msra.mxu0 0
    %482 = vmatprep.subr.bf16.mxu0 0
    %483 = vmatpush2.bf16.msra.mxu0 0
    %484 = vmatprep.subr.bf16.mxu0 0
    %485 = vmatpush2.bf16.msra.mxu0 0
    %486 = vmatprep.mubr.bf16.mxu0 0
    %487 = vmatmul.mubr.bf16.gmra.mxu0 %v198
    %v488 = vpop.f32.mrf.mxu0
    %v489 = vadd.f32 0.0, %v488
    %v490 = vpop.f32.mrf.mxu0
    %v491 = vadd.f32 0.0, %v490
    %v492 = vpop.f32.mrf.mxu0
    %v493 = vpop.f32.mrf.mxu0
    %494 = vdwg.mxu0
    %495 = vmatprep.subr.bf16.mxu0 0
    %496 = vmatpush1.bf16.msra.mxu0 0
    %497 = vmatprep.subr.bf16.mxu0 0
    %498 = vmatpush1.bf16.msra.mxu0 0
    %499 = vmatprep.subr.bf16.mxu0 0
    %500 = vmatpush1.bf16.msra.mxu0 0
    %501 = vmatprep.subr.bf16.mxu0 0
    %502 = vmatpush1.bf16.msra.mxu0 0
    %503 = vmatprep.subr.bf16.mxu0 0
    %504 = vmatpush1.bf16.msra.mxu0 0
    %505 = vmatprep.subr.bf16.mxu0 0
    %506 = vmatpush1.bf16.msra.mxu0 0
    %507 = vmatprep.subr.bf16.mxu0 %v241
    %508 = vmatpush1.bf16.msra.mxu0 %v238
    %509 = vmatprep.subr.bf16.mxu0 %v161
    %510 = vmatpush1.bf16.msra.mxu0 %v160
    %511 = vmatprep.subr.bf16.mxu0 0
    %512 = vmatpush2.bf16.msra.mxu0 0
    %513 = vmatprep.subr.bf16.mxu0 0
    %514 = vmatpush2.bf16.msra.mxu0 0
    %515 = vmatprep.subr.bf16.mxu0 0
    %516 = vmatpush2.bf16.msra.mxu0 0
    %517 = vmatprep.subr.bf16.mxu0 0
    %518 = vmatpush2.bf16.msra.mxu0 0
    %519 = vmatprep.subr.bf16.mxu0 0
    %520 = vmatpush2.bf16.msra.mxu0 0
    %521 = vmatprep.subr.bf16.mxu0 0
    %522 = vmatpush2.bf16.msra.mxu0 0
    %523 = vmatprep.subr.bf16.mxu0 0
    %524 = vmatpush2.bf16.msra.mxu0 0
    %525 = vmatprep.subr.bf16.mxu0 0
    %526 = vmatpush2.bf16.msra.mxu0 0
    %527 = vmatprep.mubr.bf16.mxu0 0
    %528 = vmatmul.mubr.bf16.gmra.mxu0 %v198
    %v529 = vpop.f32.mrf.mxu0
    %v530 = vadd.f32 0.0, %v529
    %v531 = vpop.f32.mrf.mxu0
    %v532 = vadd.f32 0.0, %v531
    %v533 = vpop.f32.mrf.mxu0
    %v534 = vpop.f32.mrf.mxu0
    %535 = vdwg.mxu0
    %536 = vmatprep.subr.bf16.mxu0 0
    %537 = vmatpush1.bf16.msra.mxu0 0
    %538 = vmatprep.subr.bf16.mxu0 0
    %539 = vmatpush1.bf16.msra.mxu0 0
    %540 = vmatprep.subr.bf16.mxu0 0
    %541 = vmatpush1.bf16.msra.mxu0 0
    %542 = vmatprep.subr.bf16.mxu0 0
    %543 = vmatpush1.bf16.msra.mxu0 0
    %544 = vmatprep.subr.bf16.mxu0 0
    %545 = vmatpush1.bf16.msra.mxu0 0
    %546 = vmatprep.subr.bf16.mxu0 0
    %547 = vmatpush1.bf16.msra.mxu0 0
    %548 = vmatprep.subr.bf16.mxu0 %v247
    %549 = vmatpush1.bf16.msra.mxu0 %v244
    %550 = vmatprep.subr.bf16.mxu0 %v163
    %551 = vmatpush1.bf16.msra.mxu0 %v162
    %552 = vmatprep.subr.bf16.mxu0 0
    %553 = vmatpush2.bf16.msra.mxu0 0
    %554 = vmatprep.subr.bf16.mxu0 0
    %555 = vmatpush2.bf16.msra.mxu0 0
    %556 = vmatprep.subr.bf16.mxu0 0
    %557 = vmatpush2.bf16.msra.mxu0 0
    %558 = vmatprep.subr.bf16.mxu0 0
    %559 = vmatpush2.bf16.msra.mxu0 0
    %560 = vmatprep.subr.bf16.mxu0 0
    %561 = vmatpush2.bf16.msra.mxu0 0
    %562 = vmatprep.subr.bf16.mxu0 0
    %563 = vmatpush2.bf16.msra.mxu0 0
    %564 = vmatprep.subr.bf16.mxu0 0
    %565 = vmatpush2.bf16.msra.mxu0 0
    %566 = vmatprep.subr.bf16.mxu0 0
    %567 = vmatpush2.bf16.msra.mxu0 0
    %568 = vmatprep.mubr.bf16.mxu0 0
    %569 = vmatmul.mubr.bf16.gmra.mxu0 %v198
    %v570 = vpop.f32.mrf.mxu0
    %v571 = vadd.f32 0.0, %v570
    %v572 = vpop.f32.mrf.mxu0
    %v573 = vadd.f32 0.0, %v572
    %v574 = vpop.f32.mrf.mxu0
    %v575 = vpop.f32.mrf.mxu0
    %576 = vdwg.mxu0
    %v577 = vld [vmem:[%s2] sm:$0xf]
    %v578 = vld [vmem:[%s2 + $0x4] sm:$0xf]
    %v579 = vld [vmem:[%s2 + $0x8] sm:$0xf]
    %v580 = vld [vmem:[%s2 + $0xc] sm:$0xf]
    %v581 = vld [vmem:[%s2 + $0x10] sm:$0xf]
    %v582 = vld [vmem:[%s2 + $0x14] sm:$0xf]
    %v583 = vld [vmem:[%s2 + $0x18] sm:$0xf]
    %v584 = vld [vmem:[%s2 + $0x1c] sm:$0xf]
    %v585 = vld [vmem:[%s2 + $0x20] sm:$0xf]
    %v586 = vld [vmem:[%s2 + $0x24] sm:$0xf]
    %v587 = vld [vmem:[%s2 + $0x28] sm:$0xf]
    %v588 = vld [vmem:[%s2 + $0x2c] sm:$0xf]
    %v589 = vld [vmem:[%s2 + $0x30] sm:$0xf]
    %v590 = vld [vmem:[%s2 + $0x34] sm:$0xf]
    %v591 = vld [vmem:[%s2 + $0x38] sm:$0xf]
    %v592 = vld [vmem:[%s2 + $0x3c] sm:$0xf]
    %v593 = vld [vmem:[%s2 + $0x40] sm:$0xf]
    %v594 = vld [vmem:[%s2 + $0x44] sm:$0xf]
    %v595 = vld [vmem:[%s2 + $0x48] sm:$0xf]
    %v596 = vld [vmem:[%s2 + $0x4c] sm:$0xf]
    %v597 = vld [vmem:[%s2 + $0x50] sm:$0xf]
    %v598 = vld [vmem:[%s2 + $0x54] sm:$0xf]
    %v599 = vld [vmem:[%s2 + $0x58] sm:$0xf]
    %v600 = vld [vmem:[%s2 + $0x5c] sm:$0xf]
    %v601 = vld [vmem:[%s2 + $0x60] sm:$0xf]
    %v602 = vld [vmem:[%s2 + $0x64] sm:$0xf]
    %v603 = vld [vmem:[%s2 + $0x68] sm:$0xf]
    %v604 = vld [vmem:[%s2 + $0x6c] sm:$0xf]
    %v605 = vld [vmem:[%s2 + $0x70] sm:$0xf]
    %v606 = vld [vmem:[%s2 + $0x74] sm:$0xf]
    %v607 = vld [vmem:[%s2 + $0x78] sm:$0xf]
    %v608 = vld [vmem:[%s2 + $0x7c] sm:$0xf]
    %v609 = vld [vmem:[%s2 + $0x80] sm:$0xf]
    %v610 = vld [vmem:[%s2 + $0x84] sm:$0xf]
    %v611 = vld [vmem:[%s2 + $0x88] sm:$0xf]
    %v612 = vld [vmem:[%s2 + $0x8c] sm:$0xf]
    %v613 = vld [vmem:[%s2 + $0x90] sm:$0xf]
    %v614 = vld [vmem:[%s2 + $0x94] sm:$0xf]
    %v615 = vld [vmem:[%s2 + $0x98] sm:$0xf]
    %v616 = vld [vmem:[%s2 + $0x9c] sm:$0xf]
    %v617 = vld [vmem:[%s2 + $0xa0] sm:$0xf]
    %v618 = vld [vmem:[%s2 + $0xa4] sm:$0xf]
    %v619 = vld [vmem:[%s2 + $0xa8] sm:$0xf]
    %v620 = vld [vmem:[%s2 + $0xac] sm:$0xf]
    %v621 = vld [vmem:[%s2 + $0xb0] sm:$0xf]
    %v622 = vld [vmem:[%s2 + $0xb4] sm:$0xf]
    %v623 = vld [vmem:[%s2 + $0xb8] sm:$0xf]
    %v624 = vld [vmem:[%s2 + $0xbc] sm:$0xf]
    %v625 = vld [vmem:[%s2 + $0xc0] sm:$0xf]
    %v626 = vld [vmem:[%s2 + $0xc4] sm:$0xf]
    %v627 = vld [vmem:[%s2 + $0xc8] sm:$0xf]
    %v628 = vld [vmem:[%s2 + $0xcc] sm:$0xf]
    %v629 = vld [vmem:[%s2 + $0xd0] sm:$0xf]
    %v630 = vld [vmem:[%s2 + $0xd4] sm:$0xf]
    %v631 = vld [vmem:[%s2 + $0xd8] sm:$0xf]
    %v632 = vld [vmem:[%s2 + $0xdc] sm:$0xf]
    %v633 = vld [vmem:[%s2 + $0xe0] sm:$0xf]
    %v634 = vld [vmem:[%s2 + $0xe4] sm:$0xf]
    %v635 = vld [vmem:[%s2 + $0xe8] sm:$0xf]
    %v636 = vld [vmem:[%s2 + $0xec] sm:$0xf]
    %v637 = vld [vmem:[%s2 + $0xf0] sm:$0xf]
    %v638 = vld [vmem:[%s2 + $0xf4] sm:$0xf]
    %v639 = vld [vmem:[%s2 + $0xf8] sm:$0xf]
    %v640 = vld [vmem:[%s2 + $0xfc] sm:$0xf]
    %v641 = vld [vmem:[%s2 + $0x100] sm:$0xf]
    %v642 = vld [vmem:[%s2 + $0x104] sm:$0xf]
    %v643 = vld [vmem:[%s2 + $0x108] sm:$0xf]
    %v644 = vld [vmem:[%s2 + $0x10c] sm:$0xf]
    %v645 = vld [vmem:[%s2 + $0x110] sm:$0xf]
    %v646 = vld [vmem:[%s2 + $0x114] sm:$0xf]
    %v647 = vld [vmem:[%s2 + $0x118] sm:$0xf]
    %v648 = vld [vmem:[%s2 + $0x11c] sm:$0xf]
    %v649 = vld [vmem:[%s2 + $0x120] sm:$0xf]
    %v650 = vld [vmem:[%s2 + $0x124] sm:$0xf]
    %v651 = vld [vmem:[%s2 + $0x128] sm:$0xf]
    %v652 = vld [vmem:[%s2 + $0x12c] sm:$0xf]
    %v653 = vld [vmem:[%s2 + $0x130] sm:$0xf]
    %v654 = vld [vmem:[%s2 + $0x134] sm:$0xf]
    %v655 = vld [vmem:[%s2 + $0x138] sm:$0xf]
    %v656 = vld [vmem:[%s2 + $0x13c] sm:$0xf]
    %v657 = vld [vmem:[%s2 + $0x140] sm:$0xf]
    %v658 = vld [vmem:[%s2 + $0x144] sm:$0xf]
    %v659 = vld [vmem:[%s2 + $0x148] sm:$0xf]
    %v660 = vld [vmem:[%s2 + $0x14c] sm:$0xf]
    %v661 = vld [vmem:[%s2 + $0x150] sm:$0xf]
    %v662 = vld [vmem:[%s2 + $0x154] sm:$0xf]
    %v663 = vld [vmem:[%s2 + $0x158] sm:$0xf]
    %v664 = vld [vmem:[%s2 + $0x15c] sm:$0xf]
    %v665 = vld [vmem:[%s2 + $0x160] sm:$0xf]
    %v666 = vld [vmem:[%s2 + $0x164] sm:$0xf]
    %v667 = vld [vmem:[%s2 + $0x168] sm:$0xf]
    %v668 = vld [vmem:[%s2 + $0x16c] sm:$0xf]
    %v669 = vld [vmem:[%s2 + $0x170] sm:$0xf]
    %v670 = vld [vmem:[%s2 + $0x174] sm:$0xf]
    %v671 = vld [vmem:[%s2 + $0x178] sm:$0xf]
    %v672 = vld [vmem:[%s2 + $0x17c] sm:$0xf]
    %v673 = vld [vmem:[%s2 + $0x180] sm:$0xf]
    %v674 = vld [vmem:[%s2 + $0x184] sm:$0xf]
    %v675 = vld [vmem:[%s2 + $0x188] sm:$0xf]
    %v676 = vld [vmem:[%s2 + $0x18c] sm:$0xf]
    %v677 = vld [vmem:[%s2 + $0x190] sm:$0xf]
    %v678 = vld [vmem:[%s2 + $0x194] sm:$0xf]
    %v679 = vld [vmem:[%s2 + $0x198] sm:$0xf]
    %v680 = vld [vmem:[%s2 + $0x19c] sm:$0xf]
    %v681 = vld [vmem:[%s2 + $0x1a0] sm:$0xf]
    %v682 = vld [vmem:[%s2 + $0x1a4] sm:$0xf]
    %v683 = vld [vmem:[%s2 + $0x1a8] sm:$0xf]
    %v684 = vld [vmem:[%s2 + $0x1ac] sm:$0xf]
    %v685 = vld [vmem:[%s2 + $0x1b0] sm:$0xf]
    %v686 = vld [vmem:[%s2 + $0x1b4] sm:$0xf]
    %v687 = vld [vmem:[%s2 + $0x1b8] sm:$0xf]
    %v688 = vld [vmem:[%s2 + $0x1bc] sm:$0xf]
    %v689 = vld [vmem:[%s2 + $0x1c0] sm:$0xf]
    %v690 = vld [vmem:[%s2 + $0x1c4] sm:$0xf]
    %v691 = vld [vmem:[%s2 + $0x1c8] sm:$0xf]
    %v692 = vld [vmem:[%s2 + $0x1cc] sm:$0xf]
    %v693 = vld [vmem:[%s2 + $0x1d0] sm:$0xf]
    %v694 = vld [vmem:[%s2 + $0x1d4] sm:$0xf]
    %v695 = vld [vmem:[%s2 + $0x1d8] sm:$0xf]
    %v696 = vld [vmem:[%s2 + $0x1dc] sm:$0xf]
    %v697 = vld [vmem:[%s2 + $0x1e0] sm:$0xf]
    %v698 = vld [vmem:[%s2 + $0x1e4] sm:$0xf]
    %v699 = vld [vmem:[%s2 + $0x1e8] sm:$0xf]
    %v700 = vld [vmem:[%s2 + $0x1ec] sm:$0xf]
    %v701 = vld [vmem:[%s2 + $0x1f0] sm:$0xf]
    %v702 = vld [vmem:[%s2 + $0x1f4] sm:$0xf]
    %v703 = vld [vmem:[%s2 + $0x1f8] sm:$0xf]
    %v704 = vld [vmem:[%s2 + $0x1fc] sm:$0xf]
    %v705 = vld [vmem:[%s3] sm:$0x1]
    %v706 = vmax.f32 %v284, %v325
    %v707 = vmax.f32 %v286, %v327
    %v708 = vmax.f32 %v706, %v366
    %v709 = vmax.f32 %v707, %v368
    %v710 = vmax.f32 %v708, %v407
    %v711 = vmax.f32 %v709, %v409
    %v712 = vmax.f32 %v710, 0.0
    %v713 = vmax.f32 %v711, 0.0
    %v714 = vpack.c.bf16 %v712, %v712
    %v715 = vpack.c.bf16 %v713, %v713
    %v748 = vunpack.c.l.b16 %v577
    %v749 = vunpack.c.l.b16 %v578
    %v750 = vunpack.c.l.b16 %v579
    %v751 = vunpack.c.l.b16 %v580
    %v752 = vunpack.c.l.b16 %v581
    %v753 = vunpack.c.l.b16 %v582
    %v754 = vunpack.c.l.b16 %v583
    %v755 = vunpack.c.l.b16 %v584
    %v756 = vunpack.c.l.b16 %v585
    %v757 = vunpack.c.l.b16 %v586
    %v758 = vunpack.c.l.b16 %v587
    %v759 = vunpack.c.l.b16 %v588
    %v760 = vunpack.c.l.b16 %v589
    %v761 = vunpack.c.l.b16 %v590
    %v762 = vunpack.c.l.b16 %v591
    %v763 = vunpack.c.l.b16 %v592
    %v764 = vunpack.c.l.b16 %v593
    %v765 = vunpack.c.l.b16 %v594
    %v766 = vunpack.c.l.b16 %v595
    %v767 = vunpack.c.l.b16 %v596
    %v768 = vunpack.c.l.b16 %v597
    %v769 = vunpack.c.l.b16 %v598
    %v770 = vunpack.c.l.b16 %v599
    %v771 = vunpack.c.l.b16 %v600
    %v772 = vunpack.c.l.b16 %v601
    %v773 = vunpack.c.l.b16 %v602
    %v774 = vunpack.c.l.b16 %v603
    %v775 = vunpack.c.l.b16 %v604
    %v776 = vunpack.c.l.b16 %v605
    %v777 = vunpack.c.l.b16 %v606
    %v778 = vunpack.c.l.b16 %v607
    %v779 = vunpack.c.l.b16 %v608
    %v780 = vpack.c.b16 %v749, %v748
    %v781 = vpack.c.b16 %v751, %v750
    %v782 = vpack.c.b16 %v753, %v752
    %v783 = vpack.c.b16 %v755, %v754
    %v784 = vpack.c.b16 %v757, %v756
    %v785 = vpack.c.b16 %v759, %v758
    %v786 = vpack.c.b16 %v761, %v760
    %v787 = vpack.c.b16 %v763, %v762
    %v788 = vpack.c.b16 %v765, %v764
    %v789 = vpack.c.b16 %v767, %v766
    %v790 = vpack.c.b16 %v769, %v768
    %v791 = vpack.c.b16 %v771, %v770
    %v792 = vpack.c.b16 %v773, %v772
    %v793 = vpack.c.b16 %v775, %v774
    %v794 = vpack.c.b16 %v777, %v776
    %v795 = vpack.c.b16 %v779, %v778
    %812 = vmatprep.subr.bf16.mxu0 0
    %813 = vmatpush1.bf16.msra.mxu0 %v787
    %814 = vmatprep.subr.bf16.mxu0 0
    %815 = vmatpush1.bf16.msra.mxu0 %v786
    %816 = vmatprep.subr.bf16.mxu0 0
    %817 = vmatpush1.bf16.msra.mxu0 %v785
    %818 = vmatprep.subr.bf16.mxu0 0
    %819 = vmatpush1.bf16.msra.mxu0 %v784
    %820 = vmatprep.subr.bf16.mxu0 0
    %821 = vmatpush1.bf16.msra.mxu0 %v783
    %822 = vmatprep.subr.bf16.mxu0 0
    %823 = vmatpush1.bf16.msra.mxu0 %v782
    %824 = vmatprep.subr.bf16.mxu0 0
    %825 = vmatpush1.bf16.msra.mxu0 %v781
    %826 = vmatprep.subr.bf16.mxu0 0
    %827 = vmatpush1.bf16.msra.mxu0 %v780
    %828 = vmatprep.subr.bf16.mxu0 0
    %829 = vmatpush2.bf16.msra.mxu0 %v795
    %830 = vmatprep.subr.bf16.mxu0 0
    %831 = vmatpush2.bf16.msra.mxu0 %v794
    %832 = vmatprep.subr.bf16.mxu0 0
    %833 = vmatpush2.bf16.msra.mxu0 %v793
    %834 = vmatprep.subr.bf16.mxu0 0
    %835 = vmatpush2.bf16.msra.mxu0 %v792
    %836 = vmatprep.subr.bf16.mxu0 0
    %837 = vmatpush2.bf16.msra.mxu0 %v791
    %838 = vmatprep.subr.bf16.mxu0 0
    %839 = vmatpush2.bf16.msra.mxu0 %v790
    %840 = vmatprep.subr.bf16.mxu0 0
    %841 = vmatpush2.bf16.msra.mxu0 %v789
    %842 = vmatprep.subr.bf16.mxu0 0
    %843 = vmatpush2.bf16.msra.mxu0 %v788
    %844 = vmatprep.mubr.bf16.mxu0 %v715
    %845 = vmatmul.mubr.bf16.gmra.mxu0 %v714
    %v846 = vpop.f32.mrf.mxu0
    %v847 = vadd.f32 0.0, %v846
    %v848 = vpop.f32.mrf.mxu0
    %v849 = vpop.f32.mrf.mxu0
    %v850 = vpop.f32.mrf.mxu0
    %851 = vdwg.mxu0
    %v852 = vadd.f32 %v705, %v847
    %v854 = vshrl.u32 %v714, 16
    %v857 = vshrl.u32 %v715, 16
    %v893 = vunpack.c.l.b16 %v609
    %v894 = vunpack.c.l.b16 %v610
    %v895 = vunpack.c.l.b16 %v611
    %v896 = vunpack.c.l.b16 %v612
    %v897 = vunpack.c.l.b16 %v613
    %v898 = vunpack.c.l.b16 %v614
    %v899 = vunpack.c.l.b16 %v615
    %v900 = vunpack.c.l.b16 %v616
    %v901 = vunpack.c.l.b16 %v617
    %v902 = vunpack.c.l.b16 %v618
    %v903 = vunpack.c.l.b16 %v619
    %v904 = vunpack.c.l.b16 %v620
    %v905 = vunpack.c.l.b16 %v621
    %v906 = vunpack.c.l.b16 %v622
    %v907 = vunpack.c.l.b16 %v623
    %v908 = vunpack.c.l.b16 %v624
    %v909 = vunpack.c.l.b16 %v625
    %v910 = vunpack.c.l.b16 %v626
    %v911 = vunpack.c.l.b16 %v627
    %v912 = vunpack.c.l.b16 %v628
    %v913 = vunpack.c.l.b16 %v629
    %v914 = vunpack.c.l.b16 %v630
    %v915 = vunpack.c.l.b16 %v631
    %v916 = vunpack.c.l.b16 %v632
    %v917 = vunpack.c.l.b16 %v633
    %v918 = vunpack.c.l.b16 %v634
    %v919 = vunpack.c.l.b16 %v635
    %v920 = vunpack.c.l.b16 %v636
    %v921 = vunpack.c.l.b16 %v637
    %v922 = vunpack.c.l.b16 %v638
    %v923 = vunpack.c.l.b16 %v639
    %v924 = vunpack.c.l.b16 %v640
    %v925 = vpack.c.b16 %v894, %v893
    %v926 = vpack.c.b16 %v896, %v895
    %v927 = vpack.c.b16 %v898, %v897
    %v928 = vpack.c.b16 %v900, %v899
    %v929 = vpack.c.b16 %v902, %v901
    %v930 = vpack.c.b16 %v904, %v903
    %v931 = vpack.c.b16 %v906, %v905
    %v932 = vpack.c.b16 %v908, %v907
    %v933 = vpack.c.b16 %v910, %v909
    %v934 = vpack.c.b16 %v912, %v911
    %v935 = vpack.c.b16 %v914, %v913
    %v936 = vpack.c.b16 %v916, %v915
    %v937 = vpack.c.b16 %v918, %v917
    %v938 = vpack.c.b16 %v920, %v919
    %v939 = vpack.c.b16 %v922, %v921
    %v940 = vpack.c.b16 %v924, %v923
    %957 = vmatprep.subr.bf16.mxu0 0
    %958 = vmatpush1.bf16.msra.mxu0 %v932
    %959 = vmatprep.subr.bf16.mxu0 0
    %960 = vmatpush1.bf16.msra.mxu0 %v931
    %961 = vmatprep.subr.bf16.mxu0 0
    %962 = vmatpush1.bf16.msra.mxu0 %v930
    %963 = vmatprep.subr.bf16.mxu0 0
    %964 = vmatpush1.bf16.msra.mxu0 %v929
    %965 = vmatprep.subr.bf16.mxu0 0
    %966 = vmatpush1.bf16.msra.mxu0 %v928
    %967 = vmatprep.subr.bf16.mxu0 0
    %968 = vmatpush1.bf16.msra.mxu0 %v927
    %969 = vmatprep.subr.bf16.mxu0 0
    %970 = vmatpush1.bf16.msra.mxu0 %v926
    %971 = vmatprep.subr.bf16.mxu0 0
    %972 = vmatpush1.bf16.msra.mxu0 %v925
    %973 = vmatprep.subr.bf16.mxu0 0
    %974 = vmatpush2.bf16.msra.mxu0 %v940
    %975 = vmatprep.subr.bf16.mxu0 0
    %976 = vmatpush2.bf16.msra.mxu0 %v939
    %977 = vmatprep.subr.bf16.mxu0 0
    %978 = vmatpush2.bf16.msra.mxu0 %v938
    %979 = vmatprep.subr.bf16.mxu0 0
    %980 = vmatpush2.bf16.msra.mxu0 %v937
    %981 = vmatprep.subr.bf16.mxu0 0
    %982 = vmatpush2.bf16.msra.mxu0 %v936
    %983 = vmatprep.subr.bf16.mxu0 0
    %984 = vmatpush2.bf16.msra.mxu0 %v935
    %985 = vmatprep.subr.bf16.mxu0 0
    %986 = vmatpush2.bf16.msra.mxu0 %v934
    %987 = vmatprep.subr.bf16.mxu0 0
    %988 = vmatpush2.bf16.msra.mxu0 %v933
    %989 = vmatprep.mubr.bf16.mxu0 %v857
    %990 = vmatmul.mubr.bf16.gmra.mxu0 %v854
    %v991 = vpop.f32.mrf.mxu0
    %v992 = vadd.f32 0.0, %v991
    %v993 = vpop.f32.mrf.mxu0
    %v994 = vpop.f32.mrf.mxu0
    %v995 = vpop.f32.mrf.mxu0
    %996 = vdwg.mxu0
    %v997 = vadd.f32 %v852, %v992
    %v1000 = vrot.slane %v714, 1
    %v1001 = vrot.slane %v715, 1
    %v1036 = vunpack.c.l.b16 %v641
    %v1037 = vunpack.c.l.b16 %v642
    %v1038 = vunpack.c.l.b16 %v643
    %v1039 = vunpack.c.l.b16 %v644
    %v1040 = vunpack.c.l.b16 %v645
    %v1041 = vunpack.c.l.b16 %v646
    %v1042 = vunpack.c.l.b16 %v647
    %v1043 = vunpack.c.l.b16 %v648
    %v1044 = vunpack.c.l.b16 %v649
    %v1045 = vunpack.c.l.b16 %v650
    %v1046 = vunpack.c.l.b16 %v651
    %v1047 = vunpack.c.l.b16 %v652
    %v1048 = vunpack.c.l.b16 %v653
    %v1049 = vunpack.c.l.b16 %v654
    %v1050 = vunpack.c.l.b16 %v655
    %v1051 = vunpack.c.l.b16 %v656
    %v1052 = vunpack.c.l.b16 %v657
    %v1053 = vunpack.c.l.b16 %v658
    %v1054 = vunpack.c.l.b16 %v659
    %v1055 = vunpack.c.l.b16 %v660
    %v1056 = vunpack.c.l.b16 %v661
    %v1057 = vunpack.c.l.b16 %v662
    %v1058 = vunpack.c.l.b16 %v663
    %v1059 = vunpack.c.l.b16 %v664
    %v1060 = vunpack.c.l.b16 %v665
    %v1061 = vunpack.c.l.b16 %v666
    %v1062 = vunpack.c.l.b16 %v667
    %v1063 = vunpack.c.l.b16 %v668
    %v1064 = vunpack.c.l.b16 %v669
    %v1065 = vunpack.c.l.b16 %v670
    %v1066 = vunpack.c.l.b16 %v671
    %v1067 = vunpack.c.l.b16 %v672
    %v1068 = vpack.c.b16 %v1037, %v1036
    %v1069 = vpack.c.b16 %v1039, %v1038
    %v1070 = vpack.c.b16 %v1041, %v1040
    %v1071 = vpack.c.b16 %v1043, %v1042
    %v1072 = vpack.c.b16 %v1045, %v1044
    %v1073 = vpack.c.b16 %v1047, %v1046
    %v1074 = vpack.c.b16 %v1049, %v1048
    %v1075 = vpack.c.b16 %v1051, %v1050
    %v1076 = vpack.c.b16 %v1053, %v1052
    %v1077 = vpack.c.b16 %v1055, %v1054
    %v1078 = vpack.c.b16 %v1057, %v1056
    %v1079 = vpack.c.b16 %v1059, %v1058
    %v1080 = vpack.c.b16 %v1061, %v1060
    %v1081 = vpack.c.b16 %v1063, %v1062
    %v1082 = vpack.c.b16 %v1065, %v1064
    %v1083 = vpack.c.b16 %v1067, %v1066
    %1100 = vmatprep.subr.bf16.mxu0 0
    %1101 = vmatpush1.bf16.msra.mxu0 %v1075
    %1102 = vmatprep.subr.bf16.mxu0 0
    %1103 = vmatpush1.bf16.msra.mxu0 %v1074
    %1104 = vmatprep.subr.bf16.mxu0 0
    %1105 = vmatpush1.bf16.msra.mxu0 %v1073
    %1106 = vmatprep.subr.bf16.mxu0 0
    %1107 = vmatpush1.bf16.msra.mxu0 %v1072
    %1108 = vmatprep.subr.bf16.mxu0 0
    %1109 = vmatpush1.bf16.msra.mxu0 %v1071
    %1110 = vmatprep.subr.bf16.mxu0 0
    %1111 = vmatpush1.bf16.msra.mxu0 %v1070
    %1112 = vmatprep.subr.bf16.mxu0 0
    %1113 = vmatpush1.bf16.msra.mxu0 %v1069
    %1114 = vmatprep.subr.bf16.mxu0 0
    %1115 = vmatpush1.bf16.msra.mxu0 %v1068
    %1116 = vmatprep.subr.bf16.mxu0 0
    %1117 = vmatpush2.bf16.msra.mxu0 %v1083
    %1118 = vmatprep.subr.bf16.mxu0 0
    %1119 = vmatpush2.bf16.msra.mxu0 %v1082
    %1120 = vmatprep.subr.bf16.mxu0 0
    %1121 = vmatpush2.bf16.msra.mxu0 %v1081
    %1122 = vmatprep.subr.bf16.mxu0 0
    %1123 = vmatpush2.bf16.msra.mxu0 %v1080
    %1124 = vmatprep.subr.bf16.mxu0 0
    %1125 = vmatpush2.bf16.msra.mxu0 %v1079
    %1126 = vmatprep.subr.bf16.mxu0 0
    %1127 = vmatpush2.bf16.msra.mxu0 %v1078
    %1128 = vmatprep.subr.bf16.mxu0 0
    %1129 = vmatpush2.bf16.msra.mxu0 %v1077
    %1130 = vmatprep.subr.bf16.mxu0 0
    %1131 = vmatpush2.bf16.msra.mxu0 %v1076
    %1132 = vmatprep.mubr.bf16.mxu0 %v1001
    %1133 = vmatmul.mubr.bf16.gmra.mxu0 %v1000
    %v1134 = vpop.f32.mrf.mxu0
    %v1135 = vadd.f32 0.0, %v1134
    %v1136 = vpop.f32.mrf.mxu0
    %v1137 = vpop.f32.mrf.mxu0
    %v1138 = vpop.f32.mrf.mxu0
    %1139 = vdwg.mxu0
    %v1140 = vadd.f32 %v997, %v1135
    %v1141 = vrot.slane %v854, 1
    %v1142 = vrot.slane %v857, 1
    %v1177 = vunpack.c.l.b16 %v673
    %v1178 = vunpack.c.l.b16 %v674
    %v1179 = vunpack.c.l.b16 %v675
    %v1180 = vunpack.c.l.b16 %v676
    %v1181 = vunpack.c.l.b16 %v677
    %v1182 = vunpack.c.l.b16 %v678
    %v1183 = vunpack.c.l.b16 %v679
    %v1184 = vunpack.c.l.b16 %v680
    %v1185 = vunpack.c.l.b16 %v681
    %v1186 = vunpack.c.l.b16 %v682
    %v1187 = vunpack.c.l.b16 %v683
    %v1188 = vunpack.c.l.b16 %v684
    %v1189 = vunpack.c.l.b16 %v685
    %v1190 = vunpack.c.l.b16 %v686
    %v1191 = vunpack.c.l.b16 %v687
    %v1192 = vunpack.c.l.b16 %v688
    %v1193 = vunpack.c.l.b16 %v689
    %v1194 = vunpack.c.l.b16 %v690
    %v1195 = vunpack.c.l.b16 %v691
    %v1196 = vunpack.c.l.b16 %v692
    %v1197 = vunpack.c.l.b16 %v693
    %v1198 = vunpack.c.l.b16 %v694
    %v1199 = vunpack.c.l.b16 %v695
    %v1200 = vunpack.c.l.b16 %v696
    %v1201 = vunpack.c.l.b16 %v697
    %v1202 = vunpack.c.l.b16 %v698
    %v1203 = vunpack.c.l.b16 %v699
    %v1204 = vunpack.c.l.b16 %v700
    %v1205 = vunpack.c.l.b16 %v701
    %v1206 = vunpack.c.l.b16 %v702
    %v1207 = vunpack.c.l.b16 %v703
    %v1208 = vunpack.c.l.b16 %v704
    %v1209 = vpack.c.b16 %v1178, %v1177
    %v1210 = vpack.c.b16 %v1180, %v1179
    %v1211 = vpack.c.b16 %v1182, %v1181
    %v1212 = vpack.c.b16 %v1184, %v1183
    %v1213 = vpack.c.b16 %v1186, %v1185
    %v1214 = vpack.c.b16 %v1188, %v1187
    %v1215 = vpack.c.b16 %v1190, %v1189
    %v1216 = vpack.c.b16 %v1192, %v1191
    %v1217 = vpack.c.b16 %v1194, %v1193
    %v1218 = vpack.c.b16 %v1196, %v1195
    %v1219 = vpack.c.b16 %v1198, %v1197
    %v1220 = vpack.c.b16 %v1200, %v1199
    %v1221 = vpack.c.b16 %v1202, %v1201
    %v1222 = vpack.c.b16 %v1204, %v1203
    %v1223 = vpack.c.b16 %v1206, %v1205
    %v1224 = vpack.c.b16 %v1208, %v1207
    %1241 = vmatprep.subr.bf16.mxu0 0
    %1242 = vmatpush1.bf16.msra.mxu0 %v1216
    %1243 = vmatprep.subr.bf16.mxu0 0
    %1244 = vmatpush1.bf16.msra.mxu0 %v1215
    %1245 = vmatprep.subr.bf16.mxu0 0
    %1246 = vmatpush1.bf16.msra.mxu0 %v1214
    %1247 = vmatprep.subr.bf16.mxu0 0
    %1248 = vmatpush1.bf16.msra.mxu0 %v1213
    %1249 = vmatprep.subr.bf16.mxu0 0
    %1250 = vmatpush1.bf16.msra.mxu0 %v1212
    %1251 = vmatprep.subr.bf16.mxu0 0
    %1252 = vmatpush1.bf16.msra.mxu0 %v1211
    %1253 = vmatprep.subr.bf16.mxu0 0
    %1254 = vmatpush1.bf16.msra.mxu0 %v1210
    %1255 = vmatprep.subr.bf16.mxu0 0
    %1256 = vmatpush1.bf16.msra.mxu0 %v1209
    %1257 = vmatprep.subr.bf16.mxu0 0
    %1258 = vmatpush2.bf16.msra.mxu0 %v1224
    %1259 = vmatprep.subr.bf16.mxu0 0
    %1260 = vmatpush2.bf16.msra.mxu0 %v1223
    %1261 = vmatprep.subr.bf16.mxu0 0
    %1262 = vmatpush2.bf16.msra.mxu0 %v1222
    %1263 = vmatprep.subr.bf16.mxu0 0
    %1264 = vmatpush2.bf16.msra.mxu0 %v1221
    %1265 = vmatprep.subr.bf16.mxu0 0
    %1266 = vmatpush2.bf16.msra.mxu0 %v1220
    %1267 = vmatprep.subr.bf16.mxu0 0
    %1268 = vmatpush2.bf16.msra.mxu0 %v1219
    %1269 = vmatprep.subr.bf16.mxu0 0
    %1270 = vmatpush2.bf16.msra.mxu0 %v1218
    %1271 = vmatprep.subr.bf16.mxu0 0
    %1272 = vmatpush2.bf16.msra.mxu0 %v1217
    %1273 = vmatprep.mubr.bf16.mxu0 %v1142
    %1274 = vmatmul.mubr.bf16.gmra.mxu0 %v1141
    %v1275 = vpop.f32.mrf.mxu0
    %v1276 = vadd.f32 0.0, %v1275
    %v1277 = vpop.f32.mrf.mxu0
    %v1278 = vpop.f32.mrf.mxu0
    %v1279 = vpop.f32.mrf.mxu0
    %1280 = vdwg.mxu0
    %v1281 = vadd.f32 %v1140, %v1276
    %v1282 = vmax.f32 %v448, %v489
    %v1283 = vmax.f32 %v450, %v491
    %v1284 = vmax.f32 %v1282, %v530
    %v1285 = vmax.f32 %v1283, %v532
    %v1286 = vmax.f32 %v1284, %v571
    %v1287 = vmax.f32 %v1285, %v573
    %v1288 = vmax.f32 %v1286, 0.0
    %v1289 = vmax.f32 %v1287, 0.0
    %v1290 = vpack.c.bf16 %v1288, %v1288
    %v1291 = vpack.c.bf16 %v1289, %v1289
    %1292 = vmatprep.subr.bf16.mxu0 0
    %1293 = vmatpush1.bf16.msra.mxu0 %v787
    %1294 = vmatprep.subr.bf16.mxu0 0
    %1295 = vmatpush1.bf16.msra.mxu0 %v786
    %1296 = vmatprep.subr.bf16.mxu0 0
    %1297 = vmatpush1.bf16.msra.mxu0 %v785
    %1298 = vmatprep.subr.bf16.mxu0 0
    %1299 = vmatpush1.bf16.msra.mxu0 %v784
    %1300 = vmatprep.subr.bf16.mxu0 0
    %1301 = vmatpush1.bf16.msra.mxu0 %v783
    %1302 = vmatprep.subr.bf16.mxu0 0
    %1303 = vmatpush1.bf16.msra.mxu0 %v782
    %1304 = vmatprep.subr.bf16.mxu0 0
    %1305 = vmatpush1.bf16.msra.mxu0 %v781
    %1306 = vmatprep.subr.bf16.mxu0 0
    %1307 = vmatpush1.bf16.msra.mxu0 %v780
    %1308 = vmatprep.subr.bf16.mxu0 0
    %1309 = vmatpush2.bf16.msra.mxu0 %v795
    %1310 = vmatprep.subr.bf16.mxu0 0
    %1311 = vmatpush2.bf16.msra.mxu0 %v794
    %1312 = vmatprep.subr.bf16.mxu0 0
    %1313 = vmatpush2.bf16.msra.mxu0 %v793
    %1314 = vmatprep.subr.bf16.mxu0 0
    %1315 = vmatpush2.bf16.msra.mxu0 %v792
    %1316 = vmatprep.subr.bf16.mxu0 0
    %1317 = vmatpush2.bf16.msra.mxu0 %v791
    %1318 = vmatprep.subr.bf16.mxu0 0
    %1319 = vmatpush2.bf16.msra.mxu0 %v790
    %1320 = vmatprep.subr.bf16.mxu0 0
    %1321 = vmatpush2.bf16.msra.mxu0 %v789
    %1322 = vmatprep.subr.bf16.mxu0 0
    %1323 = vmatpush2.bf16.msra.mxu0 %v788
    %1324 = vmatprep.mubr.bf16.mxu0 %v1291
    %1325 = vmatmul.mubr.bf16.gmra.mxu0 %v1290
    %v1326 = vpop.f32.mrf.mxu0
    %v1327 = vadd.f32 0.0, %v1326
    %v1328 = vpop.f32.mrf.mxu0
    %v1329 = vpop.f32.mrf.mxu0
    %v1330 = vpop.f32.mrf.mxu0
    %1331 = vdwg.mxu0
    %v1332 = vadd.f32 %v705, %v1327
    %v1334 = vshrl.u32 %v1290, 16
    %v1337 = vshrl.u32 %v1291, 16
    %1341 = vmatprep.subr.bf16.mxu0 0
    %1342 = vmatpush1.bf16.msra.mxu0 %v932
    %1343 = vmatprep.subr.bf16.mxu0 0
    %1344 = vmatpush1.bf16.msra.mxu0 %v931
    %1345 = vmatprep.subr.bf16.mxu0 0
    %1346 = vmatpush1.bf16.msra.mxu0 %v930
    %1347 = vmatprep.subr.bf16.mxu0 0
    %1348 = vmatpush1.bf16.msra.mxu0 %v929
    %1349 = vmatprep.subr.bf16.mxu0 0
    %1350 = vmatpush1.bf16.msra.mxu0 %v928
    %1351 = vmatprep.subr.bf16.mxu0 0
    %1352 = vmatpush1.bf16.msra.mxu0 %v927
    %1353 = vmatprep.subr.bf16.mxu0 0
    %1354 = vmatpush1.bf16.msra.mxu0 %v926
    %1355 = vmatprep.subr.bf16.mxu0 0
    %1356 = vmatpush1.bf16.msra.mxu0 %v925
    %1357 = vmatprep.subr.bf16.mxu0 0
    %1358 = vmatpush2.bf16.msra.mxu0 %v940
    %1359 = vmatprep.subr.bf16.mxu0 0
    %1360 = vmatpush2.bf16.msra.mxu0 %v939
    %1361 = vmatprep.subr.bf16.mxu0 0
    %1362 = vmatpush2.bf16.msra.mxu0 %v938
    %1363 = vmatprep.subr.bf16.mxu0 0
    %1364 = vmatpush2.bf16.msra.mxu0 %v937
    %1365 = vmatprep.subr.bf16.mxu0 0
    %1366 = vmatpush2.bf16.msra.mxu0 %v936
    %1367 = vmatprep.subr.bf16.mxu0 0
    %1368 = vmatpush2.bf16.msra.mxu0 %v935
    %1369 = vmatprep.subr.bf16.mxu0 0
    %1370 = vmatpush2.bf16.msra.mxu0 %v934
    %1371 = vmatprep.subr.bf16.mxu0 0
    %1372 = vmatpush2.bf16.msra.mxu0 %v933
    %1373 = vmatprep.mubr.bf16.mxu0 %v1337
    %1374 = vmatmul.mubr.bf16.gmra.mxu0 %v1334
    %v1375 = vpop.f32.mrf.mxu0
    %v1376 = vadd.f32 0.0, %v1375
    %v1377 = vpop.f32.mrf.mxu0
    %v1378 = vpop.f32.mrf.mxu0
    %v1379 = vpop.f32.mrf.mxu0
    %1380 = vdwg.mxu0
    %v1381 = vadd.f32 %v1332, %v1376
    %v1384 = vrot.slane %v1290, 1
    %v1385 = vrot.slane %v1291, 1
    %1388 = vmatprep.subr.bf16.mxu0 0
    %1389 = vmatpush1.bf16.msra.mxu0 %v1075
    %1390 = vmatprep.subr.bf16.mxu0 0
    %1391 = vmatpush1.bf16.msra.mxu0 %v1074
    %1392 = vmatprep.subr.bf16.mxu0 0
    %1393 = vmatpush1.bf16.msra.mxu0 %v1073
    %1394 = vmatprep.subr.bf16.mxu0 0
    %1395 = vmatpush1.bf16.msra.mxu0 %v1072
    %1396 = vmatprep.subr.bf16.mxu0 0
    %1397 = vmatpush1.bf16.msra.mxu0 %v1071
    %1398 = vmatprep.subr.bf16.mxu0 0
    %1399 = vmatpush1.bf16.msra.mxu0 %v1070
    %1400 = vmatprep.subr.bf16.mxu0 0
    %1401 = vmatpush1.bf16.msra.mxu0 %v1069
    %1402 = vmatprep.subr.bf16.mxu0 0
    %1403 = vmatpush1.bf16.msra.mxu0 %v1068
    %1404 = vmatprep.subr.bf16.mxu0 0
    %1405 = vmatpush2.bf16.msra.mxu0 %v1083
    %1406 = vmatprep.subr.bf16.mxu0 0
    %1407 = vmatpush2.bf16.msra.mxu0 %v1082
    %1408 = vmatprep.subr.bf16.mxu0 0
    %1409 = vmatpush2.bf16.msra.mxu0 %v1081
    %1410 = vmatprep.subr.bf16.mxu0 0
    %1411 = vmatpush2.bf16.msra.mxu0 %v1080
    %1412 = vmatprep.subr.bf16.mxu0 0
    %1413 = vmatpush2.bf16.msra.mxu0 %v1079
    %1414 = vmatprep.subr.bf16.mxu0 0
    %1415 = vmatpush2.bf16.msra.mxu0 %v1078
    %1416 = vmatprep.subr.bf16.mxu0 0
    %1417 = vmatpush2.bf16.msra.mxu0 %v1077
    %1418 = vmatprep.subr.bf16.mxu0 0
    %1419 = vmatpush2.bf16.msra.mxu0 %v1076
    %1420 = vmatprep.mubr.bf16.mxu0 %v1385
    %1421 = vmatmul.mubr.bf16.gmra.mxu0 %v1384
    %v1422 = vpop.f32.mrf.mxu0
    %v1423 = vadd.f32 0.0, %v1422
    %v1424 = vpop.f32.mrf.mxu0
    %v1425 = vpop.f32.mrf.mxu0
    %v1426 = vpop.f32.mrf.mxu0
    %1427 = vdwg.mxu0
    %v1428 = vadd.f32 %v1381, %v1423
    %v1429 = vrot.slane %v1334, 1
    %v1430 = vrot.slane %v1337, 1
    %1433 = vmatprep.subr.bf16.mxu0 0
    %1434 = vmatpush1.bf16.msra.mxu0 %v1216
    %1435 = vmatprep.subr.bf16.mxu0 0
    %1436 = vmatpush1.bf16.msra.mxu0 %v1215
    %1437 = vmatprep.subr.bf16.mxu0 0
    %1438 = vmatpush1.bf16.msra.mxu0 %v1214
    %1439 = vmatprep.subr.bf16.mxu0 0
    %1440 = vmatpush1.bf16.msra.mxu0 %v1213
    %1441 = vmatprep.subr.bf16.mxu0 0
    %1442 = vmatpush1.bf16.msra.mxu0 %v1212
    %1443 = vmatprep.subr.bf16.mxu0 0
    %1444 = vmatpush1.bf16.msra.mxu0 %v1211
    %1445 = vmatprep.subr.bf16.mxu0 0
    %1446 = vmatpush1.bf16.msra.mxu0 %v1210
    %1447 = vmatprep.subr.bf16.mxu0 0
    %1448 = vmatpush1.bf16.msra.mxu0 %v1209
    %1449 = vmatprep.subr.bf16.mxu0 0
    %1450 = vmatpush2.bf16.msra.mxu0 %v1224
    %1451 = vmatprep.subr.bf16.mxu0 0
    %1452 = vmatpush2.bf16.msra.mxu0 %v1223
    %1453 = vmatprep.subr.bf16.mxu0 0
    %1454 = vmatpush2.bf16.msra.mxu0 %v1222
    %1455 = vmatprep.subr.bf16.mxu0 0
    %1456 = vmatpush2.bf16.msra.mxu0 %v1221
    %1457 = vmatprep.subr.bf16.mxu0 0
    %1458 = vmatpush2.bf16.msra.mxu0 %v1220
    %1459 = vmatprep.subr.bf16.mxu0 0
    %1460 = vmatpush2.bf16.msra.mxu0 %v1219
    %1461 = vmatprep.subr.bf16.mxu0 0
    %1462 = vmatpush2.bf16.msra.mxu0 %v1218
    %1463 = vmatprep.subr.bf16.mxu0 0
    %1464 = vmatpush2.bf16.msra.mxu0 %v1217
    %1465 = vmatprep.mubr.bf16.mxu0 %v1430
    %1466 = vmatmul.mubr.bf16.gmra.mxu0 %v1429
    %v1467 = vpop.f32.mrf.mxu0
    %v1468 = vadd.f32 0.0, %v1467
    %v1469 = vpop.f32.mrf.mxu0
    %v1470 = vpop.f32.mrf.mxu0
    %v1471 = vpop.f32.mrf.mxu0
    %1472 = vdwg.mxu0
    %v1473 = vadd.f32 %v1428, %v1468
    %v1475 = vlaneseq
    %v1476 = vshrl.u32 %v1475, 7
    %v1477 = vsub.s32 0, %v1476
    %v1478 = vrot.slane %v1473, %v1477
    %vm1480 = vcmask 1040384
    %v1481 = vsel %vm1480, %v1281, %v1478
    %vm1482 = vcmask 74752
    %1483 = vst.msk [vmem:[#allocation2] sm:$0x3] %vm1482, %v1481
    // Predicated region
    $region18: #{modelc_forward.1} parent=1 // pred_check
      _
    $region19: #{modelc_forward.1} parent=1 // pred_check_branch
      %1485 = sbr.rel (0) target = $region21
    $region20: #{modelc_forward.1} parent=1 // pred_region
      %s1487 = ssub.s32 32, 32
      %1488 = vsyncadd [#allocation3], %s1487
      %s1490 = sshll.u32 [#allocation2], 4
      %s1491 = int_to_ptr.vmem [resolvable:$true] %s1490
      %1493 = dma.vmem_to_hbm [thread:$0]  %s1491, 32, %s4, [#allocation3]
    $region21: #{modelc_forward.1} parent=1 // pred_fallthru
      _
    // Predicated region
    $region22: #{modelc_forward.1} parent=1 // pred_check
      _
    $region23: #{modelc_forward.1} parent=1 // pred_check_branch
      %1495 = sbr.rel (0) target = $region25
    $region24: #{modelc_forward.1} parent=1 // pred_region
      %1496 = dma.done [#allocation3], 32
    $region25: #{modelc_forward.1} parent=1 // pred_fallthru
      _
    %1497 = vsyncpa [#allocation3], 1

</llo_original>
